<compile_context>
chip_gen: v7x
topology: tpu7x:2x2x1
jax: 0.10.0
libtpu: 0.0.40
codegen_flags: <defaults>
</compile_context>

<pallas_src>
import functools

import jax
import jax.numpy as jnp
from jax.experimental import pallas as pl
from jax.experimental.pallas import tpu as pltpu


def _mha_kernel(x_ref, y_ref, wq_ref, bq_ref, wk_ref, bk_ref, wv_ref, bv_ref,
                wp_ref, bp_ref, out_ref, attn_ref,
                q_scr, k_scr, v_scr, ctx_scr, *,
                num_heads, head_dim, compute_dtype):
    H, hd = num_heads, head_dim
    j = pl.program_id(1)

    # ---- K/V projection: once per batch element (j == 0), dense matmuls ----
    @pl.when(j == 0)
    def _():
        yv = y_ref[0].astype(compute_dtype)                        # (m, d_ref)
        k_full = jnp.dot(yv, wk_ref[...], preferred_element_type=jnp.float32)
        k_full = (k_full + bk_ref[...]).astype(compute_dtype)      # (m, c)
        v_full = jnp.dot(yv, wv_ref[...], preferred_element_type=jnp.float32)
        v_full = (v_full + bv_ref[...]).astype(compute_dtype)      # (m, c)
        # Cheap head-major relayout: static-slice vector copies, no matmuls.
        for h in range(H):
            sl = slice(h * hd, (h + 1) * hd)
            k_scr[h] = k_full[:, sl]
            v_scr[h] = v_full[:, sl]

    # ---- Q projection (scale folded into Wq/bq in the wrapper) -------------
    xv = x_ref[0].astype(compute_dtype)                            # (tn, c)
    q_full = jnp.dot(xv, wq_ref[...], preferred_element_type=jnp.float32)
    q_full = (q_full + bq_ref[...]).astype(compute_dtype)          # (tn, c)
    for h in range(H):
        q_scr[h] = q_full[:, h * hd:(h + 1) * hd]                  # (tn, hd)

    # ---- scores (H, tn, m): head-batched trans_b matmul ---------------------
    s = jax.lax.dot_general(q_scr[...], k_scr[...],
                            (((2,), (2,)), ((0,), (0,))),
                            preferred_element_type=jnp.float32)

    # ---- softmax over m, exact f32 (this matrix is returned to the caller) -
    s = s - jnp.max(s, axis=-1, keepdims=True)
    e = jnp.exp(s)
    p = e * (1.0 / jnp.sum(e, axis=-1, keepdims=True))             # (H, tn, m)
    attn_ref[0] = p.astype(attn_ref.dtype)                         # lane-dense

    # ---- context (H, tn, hd): head-batched canonical matmul ----------------
    ctx = jax.lax.dot_general(p.astype(compute_dtype), v_scr[...],
                              (((2,), (1,)), ((0,), (0,))),
                              preferred_element_type=jnp.float32)
    ctx = ctx.astype(compute_dtype)
    for h in range(H):
        ctx_scr[:, h * hd:(h + 1) * hd] = ctx[h]                   # (tn, c)

    # ---- output projection: one dense (tn, c) x (c, c) matmul ---------------
    out = jnp.dot(ctx_scr[...], wp_ref[...], preferred_element_type=jnp.float32)
    out_ref[0] = (out + bp_ref[...]).astype(out_ref.dtype)


def _vmem_limit_bytes():
    """Generation-aware scoped-VMEM request (~48 MiB v7x, ~96 MiB v5e/v6e)."""
    cap = 64 * 1024 * 1024
    try:
        cap = int(getattr(pltpu.get_tpu_info(), "vmem_capacity_bytes", cap))
    except Exception:
        pass
    return max(32 * 1024 * 1024, (cap * 3) // 4)


def _select_q_tile(n, m, c, d_ref, H, io_bytes, vmem_limit, compute_bytes=2):
    """Largest query tile whose per-step VMEM footprint fits the budget,
    preferring tiles that minimize query padding."""
    def step_bytes(tn):
        blocks = 2 * tn * c * compute_bytes            # x tile (double-buffered)
        blocks += 2 * m * d_ref * compute_bytes        # y block
        blocks += 2 * tn * c * io_bytes                # out block
        blocks += 2 * H * tn * m * io_bytes            # attention block
        weights = 2 * (2 * c * c + 2 * d_ref * c) * compute_bytes + 2 * 4 * c * 4
        scratch = (2 * tn * c + 2 * m * c) * compute_bytes
        live = 3 * H * tn * m * 4 + 3 * tn * c * 4 + 2 * m * c * 4
        return blocks + weights + scratch + live

    cap = max(8, -(-n // 8) * 8)                        # round n up to sublane
    cands = sorted({t for t in (512, 256, 128, 64, 32, 16, 8) if t <= cap} | {cap},
                   reverse=True)
    budget = vmem_limit - (4 << 20)
    best = None
    for t in cands:
        if step_bytes(t) > budget:
            continue
        n_pad = -(-n // t) * t
        key = (n_pad, -t)
        if best is None or key < best[0]:
            best = (key, t)
    if best is None:
        # TODO(synk): kv (m) tiling + online softmax needed for this regime.
        return cands[-1]
    return best[1]


def multi_head_attention(x, y, params, num_heads, *,
                         compute_dtype=jnp.bfloat16, q_tile=None):
    """x: (b, n, dim_self), y: (b, m, dim_ref) or None. Returns (out, attention)."""
    if y is None:
        y = x
    b, n, c = x.shape
    _, m, d_ref = y.shape
    H = num_heads
    assert c % H == 0
    hd = c // H
    scale = hd ** (-0.5)
    out_dtype = x.dtype

    wq, bq, wkv, bkv, wp, bp = params

    # One-time dense weight re-arrangement (PyTorch layout is (out, in)).
    wq_d = (wq * scale).T.astype(compute_dtype)           # (c, c), scale folded
    bq_d = (bq * scale).reshape(1, c).astype(jnp.float32)
    wk_d = wkv[:c].T.astype(compute_dtype)                 # (d_ref, c)
    bk_d = bkv[:c].reshape(1, c).astype(jnp.float32)
    wv_d = wkv[c:].T.astype(compute_dtype)                 # (d_ref, c)
    bv_d = bkv[c:].reshape(1, c).astype(jnp.float32)
    wp_d = wp.T.astype(compute_dtype)                      # (c, c)
    bp_d = bp.reshape(1, c).astype(jnp.float32)

    vmem_limit = _vmem_limit_bytes()
    io_bytes = jnp.dtype(out_dtype).itemsize
    tn = q_tile if q_tile is not None else _select_q_tile(
        n, m, c, d_ref, H, io_bytes, vmem_limit)
    n_pad = -(-n // tn) * tn

    xc = x.astype(compute_dtype)
    if n_pad != n:
        xc = jnp.pad(xc, ((0, 0), (0, n_pad - n), (0, 0)))
    yc = y.astype(compute_dtype)

    grid = (b, n_pad // tn)
    kernel = functools.partial(_mha_kernel, num_heads=H, head_dim=hd,
                               compute_dtype=compute_dtype)

    grid_spec = pltpu.PrefetchScalarGridSpec(
        num_scalar_prefetch=0,
        grid=grid,
        in_specs=[
            pl.BlockSpec((1, tn, c), lambda i, j: (i, j, 0)),       # x tile
            pl.BlockSpec((1, m, d_ref), lambda i, j: (i, 0, 0)),    # y (K/V src)
            pl.BlockSpec((c, c), lambda i, j: (0, 0)),              # Wq (dense)
            pl.BlockSpec((1, c), lambda i, j: (0, 0)),              # bq
            pl.BlockSpec((d_ref, c), lambda i, j: (0, 0)),          # Wk (dense)
            pl.BlockSpec((1, c), lambda i, j: (0, 0)),              # bk
            pl.BlockSpec((d_ref, c), lambda i, j: (0, 0)),          # Wv (dense)
            pl.BlockSpec((1, c), lambda i, j: (0, 0)),              # bv
            pl.BlockSpec((c, c), lambda i, j: (0, 0)),              # Wp (dense)
            pl.BlockSpec((1, c), lambda i, j: (0, 0)),              # bp
        ],
        out_specs=[
            pl.BlockSpec((1, tn, c), lambda i, j: (i, j, 0)),           # out
            pl.BlockSpec((1, H, tn, m), lambda i, j: (i, 0, j, 0)),     # attn
        ],
        scratch_shapes=[
            pltpu.VMEM((H, tn, hd), compute_dtype),   # q head-major
            pltpu.VMEM((H, m, hd), compute_dtype),    # k head-major (per batch)
            pltpu.VMEM((H, m, hd), compute_dtype),    # v head-major (per batch)
            pltpu.VMEM((tn, c), compute_dtype),       # ctx dense (out-proj LHS)
        ],
    )

    out_shapes = (
        jax.ShapeDtypeStruct((b, n_pad, c), out_dtype),
        jax.ShapeDtypeStruct((b, H, n_pad, m), out_dtype),
    )

    out, attn_bhnm = pl.pallas_call(
        kernel,
        out_shape=out_shapes,
        grid_spec=grid_spec,
        compiler_params=pltpu.CompilerParams(
            dimension_semantics=("parallel", "arbitrary"),
            vmem_limit_bytes=vmem_limit),
    )(xc, yc, wq_d, bq_d, wk_d, bk_d, wv_d, bv_d, wp_d, bp_d)

    out = out[:, :n]
    # Module API returns attention as (b, n, m, num_heads); the layout swap is
    # done outside the kernel so in-kernel stores stay lane-dense.
    attention = jnp.transpose(attn_bhnm[:, :, :n], (0, 2, 3, 1))
    return out, attention


def _reference(x, y, params, num_heads):
    """Pure-JAX (f32) replica of the PyTorch forward, for verification."""
    wq, bq, wkv, bkv, wp, bp = params
    b, n, c = x.shape
    _, m, _ = y.shape
    hd = c // num_heads
    scale = hd ** (-0.5)
    q = (x @ wq.T + bq).reshape(b, n, num_heads, hd)
    kv = (y @ wkv.T + bkv).reshape(b, m, 2, num_heads, hd)
    k, v = kv[:, :, 0], kv[:, :, 1]
    attn = jnp.einsum('bnhd,bmhd->bnmh', q, k) * scale
    attn = jax.nn.softmax(attn, axis=2)
    out = jnp.einsum('bnmh,bmhd->bnhd', attn, v).reshape(b, n, c)
    out = out @ wp.T + bp
    return out, attn


if __name__ == "__main__":
    # Small shapes consistent with the module: batch=2, seq=8, dim_self=dim_ref=32, heads=4.
    b, n, m = 2, 8, 8
    dim_self = 32
    dim_ref = 32
    num_heads = 4

    key = jax.random.PRNGKey(0)
    k_x, k_wq, k_bq, k_wkv, k_bkv, k_wp, k_bp = jax.random.split(key, 7)

    x = jax.random.normal(k_x, (b, n, dim_self), dtype=jnp.float32)
    y = x  # self-attention (y defaults to x in the PyTorch forward)

    # Deterministic parameter init (PyTorch nn.Linear layout: (out, in)).
    s = 0.1
    wq = s * jax.random.normal(k_wq, (dim_self, dim_self), dtype=jnp.float32)
    bq = s * jax.random.normal(k_bq, (dim_self,), dtype=jnp.float32)
    wkv = s * jax.random.normal(k_wkv, (2 * dim_self, dim_ref), dtype=jnp.float32)
    bkv = s * jax.random.normal(k_bkv, (2 * dim_self,), dtype=jnp.float32)
    wp = s * jax.random.normal(k_wp, (dim_self, dim_self), dtype=jnp.float32)
    bp = s * jax.random.normal(k_bp, (dim_self,), dtype=jnp.float32)
    params = (wq, bq, wkv, bkv, wp, bp)

    out, attn = multi_head_attention(x, y, params, num_heads)
    out = jax.block_until_ready(out)
    attn = jax.block_until_ready(attn)

    out_ref, attn_ref = _reference(x, y, params, num_heads)
    assert out.shape == (b, n, dim_self)
    assert attn.shape == (b, n, m, num_heads)
    # bf16 MXU matmuls (f32 accumulation / f32 softmax) -> loosen tolerances.
    assert jnp.allclose(out, out_ref, atol=2e-2, rtol=2e-2)
    assert jnp.allclose(attn, attn_ref, atol=2e-2, rtol=2e-2)

    print("KERNEL_OK")
</pallas_src>

<mosaic_0001>
module attributes {stable_mosaic.version = 11 : i64} {
  func.func @_mha_kernel(%arg0: i32, %arg1: i32, %arg2: memref<1x8x32xbf16, #tpu.memory_space<vmem>>, %arg3: memref<1x8x32xbf16, #tpu.memory_space<vmem>>, %arg4: memref<32x32xbf16, #tpu.memory_space<vmem>>, %arg5: memref<1x32xf32, #tpu.memory_space<vmem>>, %arg6: memref<32x32xbf16, #tpu.memory_space<vmem>>, %arg7: memref<1x32xf32, #tpu.memory_space<vmem>>, %arg8: memref<32x32xbf16, #tpu.memory_space<vmem>>, %arg9: memref<1x32xf32, #tpu.memory_space<vmem>>, %arg10: memref<32x32xbf16, #tpu.memory_space<vmem>>, %arg11: memref<1x32xf32, #tpu.memory_space<vmem>>, %arg12: memref<1x8x32xf32, #tpu.memory_space<vmem>>, %arg13: memref<1x4x8x8xf32, #tpu.memory_space<vmem>>, %arg14: memref<4x8x8xbf16, #tpu.memory_space<vmem>>, %arg15: memref<4x8x8xbf16, #tpu.memory_space<vmem>>, %arg16: memref<4x8x8xbf16, #tpu.memory_space<vmem>>, %arg17: memref<8x32xbf16, #tpu.memory_space<vmem>>) attributes {dimension_semantics = [#tpu.dimension_semantics<parallel>, #tpu.dimension_semantics<arbitrary>], iteration_bounds = array<i64: 2, 1>, scalar_prefetch = 0 : i64, scratch_operands = 4 : i64, tpu.core_type = #tpu.core_type<tc>, window_params = [{transform_indices = @transform_0, window_bounds = array<i64: 1, 8, 32>}, {transform_indices = @transform_1, window_bounds = array<i64: 1, 8, 32>}, {pipeline_mode = #tpu.pipeline_mode<synchronous>, transform_indices = @transform_2, window_bounds = array<i64: 32, 32>}, {pipeline_mode = #tpu.pipeline_mode<synchronous>, transform_indices = @transform_3, window_bounds = array<i64: 1, 32>}, {pipeline_mode = #tpu.pipeline_mode<synchronous>, transform_indices = @transform_4, window_bounds = array<i64: 32, 32>}, {pipeline_mode = #tpu.pipeline_mode<synchronous>, transform_indices = @transform_5, window_bounds = array<i64: 1, 32>}, {pipeline_mode = #tpu.pipeline_mode<synchronous>, transform_indices = @transform_6, window_bounds = array<i64: 32, 32>}, {pipeline_mode = #tpu.pipeline_mode<synchronous>, transform_indices = @transform_7, window_bounds = array<i64: 1, 32>}, {pipeline_mode = #tpu.pipeline_mode<synchronous>, transform_indices = @transform_8, window_bounds = array<i64: 32, 32>}, {pipeline_mode = #tpu.pipeline_mode<synchronous>, transform_indices = @transform_9, window_bounds = array<i64: 1, 32>}, {transform_indices = @transform_10, window_bounds = array<i64: 1, 8, 32>}, {transform_indices = @transform_11, window_bounds = array<i64: 1, 4, 8, 8>}]} {
    %c0_i32 = arith.constant 0 : i32
    %0 = arith.cmpi eq, %arg1, %c0_i32 : i32
    %1 = arith.extui %0 : i1 to i32
    %c0_i32_0 = arith.constant 0 : i32
    %2 = arith.cmpi ne, %1, %c0_i32_0 : i32
    scf.if %2 {
      %c0_49 = arith.constant 0 : index
      %c0_50 = arith.constant 0 : index
      %c0_51 = arith.constant 0 : index
      %69 = vector.load %arg3[%c0_49, %c0_50, %c0_51] : memref<1x8x32xbf16, #tpu.memory_space<vmem>>, vector<1x8x32xbf16>
      %70 = vector.shape_cast %69 : vector<1x8x32xbf16> to vector<8x32xbf16>
      %c0_52 = arith.constant 0 : index
      %c0_53 = arith.constant 0 : index
      %71 = vector.load %arg6[%c0_52, %c0_53] : memref<32x32xbf16, #tpu.memory_space<vmem>>, vector<32x32xbf16>
      %cst_54 = arith.constant dense<0.000000e+00> : vector<8x32xf32>
      %72 = tpu.matmul %70, %71, %cst_54 {dimension_numbers = #tpu.dot_dimension_numbers<[1], [0], [0], [1], [0, 0, 1, 1], [], []>} : vector<8x32xbf16>, vector<32x32xbf16>, vector<8x32xf32> -> vector<8x32xf32>
      %c0_55 = arith.constant 0 : index
      %c0_56 = arith.constant 0 : index
      %73 = vector.load %arg7[%c0_55, %c0_56] : memref<1x32xf32, #tpu.memory_space<vmem>>, vector<1x32xf32>
      %74 = vector.broadcast %73 : vector<1x32xf32> to vector<8x32xf32>
      %75 = arith.addf %72, %74 : vector<8x32xf32>
      %76 = arith.truncf %75 : vector<8x32xf32> to vector<8x32xbf16>
      %c0_57 = arith.constant 0 : index
      %c0_58 = arith.constant 0 : index
      %77 = vector.load %arg8[%c0_57, %c0_58] : memref<32x32xbf16, #tpu.memory_space<vmem>>, vector<32x32xbf16>
      %cst_59 = arith.constant dense<0.000000e+00> : vector<8x32xf32>
      %78 = tpu.matmul %70, %77, %cst_59 {dimension_numbers = #tpu.dot_dimension_numbers<[1], [0], [0], [1], [0, 0, 1, 1], [], []>} : vector<8x32xbf16>, vector<32x32xbf16>, vector<8x32xf32> -> vector<8x32xf32>
      %c0_60 = arith.constant 0 : index
      %c0_61 = arith.constant 0 : index
      %79 = vector.load %arg9[%c0_60, %c0_61] : memref<1x32xf32, #tpu.memory_space<vmem>>, vector<1x32xf32>
      %80 = vector.broadcast %79 : vector<1x32xf32> to vector<8x32xf32>
      %81 = arith.addf %78, %80 : vector<8x32xf32>
      %82 = arith.truncf %81 : vector<8x32xf32> to vector<8x32xbf16>
      %83 = vector.extract_strided_slice %76 {offsets = [0, 0], sizes = [8, 8], strides = [1, 1]} : vector<8x32xbf16> to vector<8x8xbf16>
      %c0_62 = arith.constant 0 : index
      %c0_63 = arith.constant 0 : index
      %c0_64 = arith.constant 0 : index
      %84 = vector.load %arg15[%c0_62, %c0_63, %c0_64] : memref<4x8x8xbf16, #tpu.memory_space<vmem>>, vector<1x8x8xbf16>
      %85 = vector.shape_cast %84 : vector<1x8x8xbf16> to vector<8x8xbf16>
      %86 = vector.shape_cast %83 : vector<8x8xbf16> to vector<1x8x8xbf16>
      tpu.vector_store %arg15[%c0_62, %c0_63, %c0_64], %86 {strides = array<i32>} : memref<4x8x8xbf16, #tpu.memory_space<vmem>>, vector<1x8x8xbf16>,
      %87 = vector.extract_strided_slice %82 {offsets = [0, 0], sizes = [8, 8], strides = [1, 1]} : vector<8x32xbf16> to vector<8x8xbf16>
      %c0_65 = arith.constant 0 : index
      %c0_66 = arith.constant 0 : index
      %c0_67 = arith.constant 0 : index
      %88 = vector.load %arg16[%c0_65, %c0_66, %c0_67] : memref<4x8x8xbf16, #tpu.memory_space<vmem>>, vector<1x8x8xbf16>
      %89 = vector.shape_cast %88 : vector<1x8x8xbf16> to vector<8x8xbf16>
      %90 = vector.shape_cast %87 : vector<8x8xbf16> to vector<1x8x8xbf16>
      tpu.vector_store %arg16[%c0_65, %c0_66, %c0_67], %90 {strides = array<i32>} : memref<4x8x8xbf16, #tpu.memory_space<vmem>>, vector<1x8x8xbf16>,
      %91 = vector.extract_strided_slice %76 {offsets = [0, 8], sizes = [8, 8], strides = [1, 1]} : vector<8x32xbf16> to vector<8x8xbf16>
      %c1_68 = arith.constant 1 : index
      %c0_69 = arith.constant 0 : index
      %c0_70 = arith.constant 0 : index
      %92 = vector.load %arg15[%c1_68, %c0_69, %c0_70] : memref<4x8x8xbf16, #tpu.memory_space<vmem>>, vector<1x8x8xbf16>
      %93 = vector.shape_cast %92 : vector<1x8x8xbf16> to vector<8x8xbf16>
      %94 = vector.shape_cast %91 : vector<8x8xbf16> to vector<1x8x8xbf16>
      tpu.vector_store %arg15[%c1_68, %c0_69, %c0_70], %94 {strides = array<i32>} : memref<4x8x8xbf16, #tpu.memory_space<vmem>>, vector<1x8x8xbf16>,
      %95 = vector.extract_strided_slice %82 {offsets = [0, 8], sizes = [8, 8], strides = [1, 1]} : vector<8x32xbf16> to vector<8x8xbf16>
      %c1_71 = arith.constant 1 : index
      %c0_72 = arith.constant 0 : index
      %c0_73 = arith.constant 0 : index
      %96 = vector.load %arg16[%c1_71, %c0_72, %c0_73] : memref<4x8x8xbf16, #tpu.memory_space<vmem>>, vector<1x8x8xbf16>
      %97 = vector.shape_cast %96 : vector<1x8x8xbf16> to vector<8x8xbf16>
      %98 = vector.shape_cast %95 : vector<8x8xbf16> to vector<1x8x8xbf16>
      tpu.vector_store %arg16[%c1_71, %c0_72, %c0_73], %98 {strides = array<i32>} : memref<4x8x8xbf16, #tpu.memory_space<vmem>>, vector<1x8x8xbf16>,
      %99 = vector.extract_strided_slice %76 {offsets = [0, 16], sizes = [8, 8], strides = [1, 1]} : vector<8x32xbf16> to vector<8x8xbf16>
      %c2_74 = arith.constant 2 : index
      %c0_75 = arith.constant 0 : index
      %c0_76 = arith.constant 0 : index
      %100 = vector.load %arg15[%c2_74, %c0_75, %c0_76] : memref<4x8x8xbf16, #tpu.memory_space<vmem>>, vector<1x8x8xbf16>
      %101 = vector.shape_cast %100 : vector<1x8x8xbf16> to vector<8x8xbf16>
      %102 = vector.shape_cast %99 : vector<8x8xbf16> to vector<1x8x8xbf16>
      tpu.vector_store %arg15[%c2_74, %c0_75, %c0_76], %102 {strides = array<i32>} : memref<4x8x8xbf16, #tpu.memory_space<vmem>>, vector<1x8x8xbf16>,
      %103 = vector.extract_strided_slice %82 {offsets = [0, 16], sizes = [8, 8], strides = [1, 1]} : vector<8x32xbf16> to vector<8x8xbf16>
      %c2_77 = arith.constant 2 : index
      %c0_78 = arith.constant 0 : index
      %c0_79 = arith.constant 0 : index
      %104 = vector.load %arg16[%c2_77, %c0_78, %c0_79] : memref<4x8x8xbf16, #tpu.memory_space<vmem>>, vector<1x8x8xbf16>
      %105 = vector.shape_cast %104 : vector<1x8x8xbf16> to vector<8x8xbf16>
      %106 = vector.shape_cast %103 : vector<8x8xbf16> to vector<1x8x8xbf16>
      tpu.vector_store %arg16[%c2_77, %c0_78, %c0_79], %106 {strides = array<i32>} : memref<4x8x8xbf16, #tpu.memory_space<vmem>>, vector<1x8x8xbf16>,
      %107 = vector.extract_strided_slice %76 {offsets = [0, 24], sizes = [8, 8], strides = [1, 1]} : vector<8x32xbf16> to vector<8x8xbf16>
      %c3_80 = arith.constant 3 : index
      %c0_81 = arith.constant 0 : index
      %c0_82 = arith.constant 0 : index
      %108 = vector.load %arg15[%c3_80, %c0_81, %c0_82] : memref<4x8x8xbf16, #tpu.memory_space<vmem>>, vector<1x8x8xbf16>
      %109 = vector.shape_cast %108 : vector<1x8x8xbf16> to vector<8x8xbf16>
      %110 = vector.shape_cast %107 : vector<8x8xbf16> to vector<1x8x8xbf16>
      tpu.vector_store %arg15[%c3_80, %c0_81, %c0_82], %110 {strides = array<i32>} : memref<4x8x8xbf16, #tpu.memory_space<vmem>>, vector<1x8x8xbf16>,
      %111 = vector.extract_strided_slice %82 {offsets = [0, 24], sizes = [8, 8], strides = [1, 1]} : vector<8x32xbf16> to vector<8x8xbf16>
      %c3_83 = arith.constant 3 : index
      %c0_84 = arith.constant 0 : index
      %c0_85 = arith.constant 0 : index
      %112 = vector.load %arg16[%c3_83, %c0_84, %c0_85] : memref<4x8x8xbf16, #tpu.memory_space<vmem>>, vector<1x8x8xbf16>
      %113 = vector.shape_cast %112 : vector<1x8x8xbf16> to vector<8x8xbf16>
      %114 = vector.shape_cast %111 : vector<8x8xbf16> to vector<1x8x8xbf16>
      tpu.vector_store %arg16[%c3_83, %c0_84, %c0_85], %114 {strides = array<i32>} : memref<4x8x8xbf16, #tpu.memory_space<vmem>>, vector<1x8x8xbf16>,
    } else {
    }
    %c0 = arith.constant 0 : index
    %c0_1 = arith.constant 0 : index
    %c0_2 = arith.constant 0 : index
    %3 = vector.load %arg2[%c0, %c0_1, %c0_2] : memref<1x8x32xbf16, #tpu.memory_space<vmem>>, vector<1x8x32xbf16>
    %4 = vector.shape_cast %3 : vector<1x8x32xbf16> to vector<8x32xbf16>
    %c0_3 = arith.constant 0 : index
    %c0_4 = arith.constant 0 : index
    %5 = vector.load %arg4[%c0_3, %c0_4] : memref<32x32xbf16, #tpu.memory_space<vmem>>, vector<32x32xbf16>
    %cst = arith.constant dense<0.000000e+00> : vector<8x32xf32>
    %6 = tpu.matmul %4, %5, %cst {dimension_numbers = #tpu.dot_dimension_numbers<[1], [0], [0], [1], [0, 0, 1, 1], [], []>} : vector<8x32xbf16>, vector<32x32xbf16>, vector<8x32xf32> -> vector<8x32xf32>
    %c0_5 = arith.constant 0 : index
    %c0_6 = arith.constant 0 : index
    %7 = vector.load %arg5[%c0_5, %c0_6] : memref<1x32xf32, #tpu.memory_space<vmem>>, vector<1x32xf32>
    %8 = vector.broadcast %7 : vector<1x32xf32> to vector<8x32xf32>
    %9 = arith.addf %6, %8 : vector<8x32xf32>
    %10 = arith.truncf %9 : vector<8x32xf32> to vector<8x32xbf16>
    %11 = vector.extract_strided_slice %10 {offsets = [0, 0], sizes = [8, 8], strides = [1, 1]} : vector<8x32xbf16> to vector<8x8xbf16>
    %c0_7 = arith.constant 0 : index
    %c0_8 = arith.constant 0 : index
    %c0_9 = arith.constant 0 : index
    %12 = vector.load %arg14[%c0_7, %c0_8, %c0_9] : memref<4x8x8xbf16, #tpu.memory_space<vmem>>, vector<1x8x8xbf16>
    %13 = vector.shape_cast %12 : vector<1x8x8xbf16> to vector<8x8xbf16>
    %14 = vector.shape_cast %11 : vector<8x8xbf16> to vector<1x8x8xbf16>
    tpu.vector_store %arg14[%c0_7, %c0_8, %c0_9], %14 {strides = array<i32>} : memref<4x8x8xbf16, #tpu.memory_space<vmem>>, vector<1x8x8xbf16>,
    %15 = vector.extract_strided_slice %10 {offsets = [0, 8], sizes = [8, 8], strides = [1, 1]} : vector<8x32xbf16> to vector<8x8xbf16>
    %c1 = arith.constant 1 : index
    %c0_10 = arith.constant 0 : index
    %c0_11 = arith.constant 0 : index
    %16 = vector.load %arg14[%c1, %c0_10, %c0_11] : memref<4x8x8xbf16, #tpu.memory_space<vmem>>, vector<1x8x8xbf16>
    %17 = vector.shape_cast %16 : vector<1x8x8xbf16> to vector<8x8xbf16>
    %18 = vector.shape_cast %15 : vector<8x8xbf16> to vector<1x8x8xbf16>
    tpu.vector_store %arg14[%c1, %c0_10, %c0_11], %18 {strides = array<i32>} : memref<4x8x8xbf16, #tpu.memory_space<vmem>>, vector<1x8x8xbf16>,
    %19 = vector.extract_strided_slice %10 {offsets = [0, 16], sizes = [8, 8], strides = [1, 1]} : vector<8x32xbf16> to vector<8x8xbf16>
    %c2 = arith.constant 2 : index
    %c0_12 = arith.constant 0 : index
    %c0_13 = arith.constant 0 : index
    %20 = vector.load %arg14[%c2, %c0_12, %c0_13] : memref<4x8x8xbf16, #tpu.memory_space<vmem>>, vector<1x8x8xbf16>
    %21 = vector.shape_cast %20 : vector<1x8x8xbf16> to vector<8x8xbf16>
    %22 = vector.shape_cast %19 : vector<8x8xbf16> to vector<1x8x8xbf16>
    tpu.vector_store %arg14[%c2, %c0_12, %c0_13], %22 {strides = array<i32>} : memref<4x8x8xbf16, #tpu.memory_space<vmem>>, vector<1x8x8xbf16>,
    %23 = vector.extract_strided_slice %10 {offsets = [0, 24], sizes = [8, 8], strides = [1, 1]} : vector<8x32xbf16> to vector<8x8xbf16>
    %c3 = arith.constant 3 : index
    %c0_14 = arith.constant 0 : index
    %c0_15 = arith.constant 0 : index
    %24 = vector.load %arg14[%c3, %c0_14, %c0_15] : memref<4x8x8xbf16, #tpu.memory_space<vmem>>, vector<1x8x8xbf16>
    %25 = vector.shape_cast %24 : vector<1x8x8xbf16> to vector<8x8xbf16>
    %26 = vector.shape_cast %23 : vector<8x8xbf16> to vector<1x8x8xbf16>
    tpu.vector_store %arg14[%c3, %c0_14, %c0_15], %26 {strides = array<i32>} : memref<4x8x8xbf16, #tpu.memory_space<vmem>>, vector<1x8x8xbf16>,
    %c0_16 = arith.constant 0 : index
    %c0_17 = arith.constant 0 : index
    %c0_18 = arith.constant 0 : index
    %27 = vector.load %arg14[%c0_16, %c0_17, %c0_18] : memref<4x8x8xbf16, #tpu.memory_space<vmem>>, vector<4x8x8xbf16>
    %c0_19 = arith.constant 0 : index
    %c0_20 = arith.constant 0 : index
    %c0_21 = arith.constant 0 : index
    %28 = vector.load %arg15[%c0_19, %c0_20, %c0_21] : memref<4x8x8xbf16, #tpu.memory_space<vmem>>, vector<4x8x8xbf16>
    %cst_22 = arith.constant dense<0.000000e+00> : vector<4x8x8xf32>
    %29 = tpu.matmul %27, %28, %cst_22 {dimension_numbers = #tpu.dot_dimension_numbers<[2], [2], [1], [1], [0, 0, 0, 1, 1, 1], [0], [0]>} : vector<4x8x8xbf16>, vector<4x8x8xbf16>, vector<4x8x8xf32> -> vector<4x8x8xf32>
    %cst_23 = arith.constant dense<0xFF800000> : vector<4x8xf32>
    %30 = vector.multi_reduction <maximumf>, %29, %cst_23 [2] : vector<4x8x8xf32> to vector<4x8xf32>
    %31 = vector.shape_cast %30 : vector<4x8xf32> to vector<4x8x1xf32>
    %32 = vector.broadcast %31 : vector<4x8x1xf32> to vector<4x8x8xf32>
    %33 = arith.subf %29, %32 : vector<4x8x8xf32>
    %34 = math.exp %33 : vector<4x8x8xf32>
    %cst_24 = arith.constant dense<0.000000e+00> : vector<4x8xf32>
    %35 = vector.multi_reduction <add>, %34, %cst_24 [2] : vector<4x8x8xf32> to vector<4x8xf32>
    %36 = vector.shape_cast %35 : vector<4x8xf32> to vector<4x8x1xf32>
    %cst_25 = arith.constant 1.000000e+00 : f32
    %37 = vector.broadcast %cst_25 : f32 to vector<4x8x1xf32>
    %38 = arith.divf %37, %36 : vector<4x8x1xf32>
    %39 = vector.broadcast %38 : vector<4x8x1xf32> to vector<4x8x8xf32>
    %40 = arith.mulf %34, %39 : vector<4x8x8xf32>
    %c0_26 = arith.constant 0 : index
    %c0_27 = arith.constant 0 : index
    %c0_28 = arith.constant 0 : index
    %c0_29 = arith.constant 0 : index
    %41 = vector.load %arg13[%c0_26, %c0_27, %c0_28, %c0_29] : memref<1x4x8x8xf32, #tpu.memory_space<vmem>>, vector<1x4x8x8xf32>
    %42 = vector.shape_cast %41 : vector<1x4x8x8xf32> to vector<4x8x8xf32>
    %43 = vector.shape_cast %40 : vector<4x8x8xf32> to vector<1x4x8x8xf32>
    tpu.vector_store %arg13[%c0_26, %c0_27, %c0_28, %c0_29], %43 {strides = array<i32>} : memref<1x4x8x8xf32, #tpu.memory_space<vmem>>, vector<1x4x8x8xf32>,
    %44 = arith.truncf %40 : vector<4x8x8xf32> to vector<4x8x8xbf16>
    %c0_30 = arith.constant 0 : index
    %c0_31 = arith.constant 0 : index
    %c0_32 = arith.constant 0 : index
    %45 = vector.load %arg16[%c0_30, %c0_31, %c0_32] : memref<4x8x8xbf16, #tpu.memory_space<vmem>>, vector<4x8x8xbf16>
    %cst_33 = arith.constant dense<0.000000e+00> : vector<4x8x8xf32>
    %46 = tpu.matmul %44, %45, %cst_33 {dimension_numbers = #tpu.dot_dimension_numbers<[2], [1], [1], [2], [0, 0, 0, 1, 1, 2], [0], [0]>} : vector<4x8x8xbf16>, vector<4x8x8xbf16>, vector<4x8x8xf32> -> vector<4x8x8xf32>
    %47 = arith.truncf %46 : vector<4x8x8xf32> to vector<4x8x8xbf16>
    %48 = vector.extract_strided_slice %47 {offsets = [0, 0, 0], sizes = [1, 8, 8], strides = [1, 1, 1]} : vector<4x8x8xbf16> to vector<1x8x8xbf16>
    %49 = vector.shape_cast %48 : vector<1x8x8xbf16> to vector<8x8xbf16>
    %c0_34 = arith.constant 0 : index
    %c0_35 = arith.constant 0 : index
    %50 = vector.load %arg17[%c0_34, %c0_35] : memref<8x32xbf16, #tpu.memory_space<vmem>>, vector<8x8xbf16>
    tpu.vector_store %arg17[%c0_34, %c0_35], %49 {strides = array<i32>} : memref<8x32xbf16, #tpu.memory_space<vmem>>, vector<8x8xbf16>,
    %51 = vector.extract_strided_slice %47 {offsets = [1, 0, 0], sizes = [1, 8, 8], strides = [1, 1, 1]} : vector<4x8x8xbf16> to vector<1x8x8xbf16>
    %52 = vector.shape_cast %51 : vector<1x8x8xbf16> to vector<8x8xbf16>
    %c0_36 = arith.constant 0 : index
    %c8 = arith.constant 8 : index
    %53 = vector.load %arg17[%c0_36, %c8] : memref<8x32xbf16, #tpu.memory_space<vmem>>, vector<8x8xbf16>
    tpu.vector_store %arg17[%c0_36, %c8], %52 {strides = array<i32>} : memref<8x32xbf16, #tpu.memory_space<vmem>>, vector<8x8xbf16>,
    %54 = vector.extract_strided_slice %47 {offsets = [2, 0, 0], sizes = [1, 8, 8], strides = [1, 1, 1]} : vector<4x8x8xbf16> to vector<1x8x8xbf16>
    %55 = vector.shape_cast %54 : vector<1x8x8xbf16> to vector<8x8xbf16>
    %c0_37 = arith.constant 0 : index
    %c16 = arith.constant 16 : index
    %56 = vector.load %arg17[%c0_37, %c16] : memref<8x32xbf16, #tpu.memory_space<vmem>>, vector<8x8xbf16>
    tpu.vector_store %arg17[%c0_37, %c16], %55 {strides = array<i32>} : memref<8x32xbf16, #tpu.memory_space<vmem>>, vector<8x8xbf16>,
    %57 = vector.extract_strided_slice %47 {offsets = [3, 0, 0], sizes = [1, 8, 8], strides = [1, 1, 1]} : vector<4x8x8xbf16> to vector<1x8x8xbf16>
    %58 = vector.shape_cast %57 : vector<1x8x8xbf16> to vector<8x8xbf16>
    %c0_38 = arith.constant 0 : index
    %c24 = arith.constant 24 : index
    %59 = vector.load %arg17[%c0_38, %c24] : memref<8x32xbf16, #tpu.memory_space<vmem>>, vector<8x8xbf16>
    tpu.vector_store %arg17[%c0_38, %c24], %58 {strides = array<i32>} : memref<8x32xbf16, #tpu.memory_space<vmem>>, vector<8x8xbf16>,
    %c0_39 = arith.constant 0 : index
    %c0_40 = arith.constant 0 : index
    %60 = vector.load %arg17[%c0_39, %c0_40] : memref<8x32xbf16, #tpu.memory_space<vmem>>, vector<8x32xbf16>
    %c0_41 = arith.constant 0 : index
    %c0_42 = arith.constant 0 : index
    %61 = vector.load %arg10[%c0_41, %c0_42] : memref<32x32xbf16, #tpu.memory_space<vmem>>, vector<32x32xbf16>
    %cst_43 = arith.constant dense<0.000000e+00> : vector<8x32xf32>
    %62 = tpu.matmul %60, %61, %cst_43 {dimension_numbers = #tpu.dot_dimension_numbers<[1], [0], [0], [1], [0, 0, 1, 1], [], []>} : vector<8x32xbf16>, vector<32x32xbf16>, vector<8x32xf32> -> vector<8x32xf32>
    %c0_44 = arith.constant 0 : index
    %c0_45 = arith.constant 0 : index
    %63 = vector.load %arg11[%c0_44, %c0_45] : memref<1x32xf32, #tpu.memory_space<vmem>>, vector<1x32xf32>
    %64 = vector.broadcast %63 : vector<1x32xf32> to vector<8x32xf32>
    %65 = arith.addf %62, %64 : vector<8x32xf32>
    %c0_46 = arith.constant 0 : index
    %c0_47 = arith.constant 0 : index
    %c0_48 = arith.constant 0 : index
    %66 = vector.load %arg12[%c0_46, %c0_47, %c0_48] : memref<1x8x32xf32, #tpu.memory_space<vmem>>, vector<1x8x32xf32>
    %67 = vector.shape_cast %66 : vector<1x8x32xf32> to vector<8x32xf32>
    %68 = vector.shape_cast %65 : vector<8x32xf32> to vector<1x8x32xf32>
    tpu.vector_store %arg12[%c0_46, %c0_47, %c0_48], %68 {strides = array<i32>} : memref<1x8x32xf32, #tpu.memory_space<vmem>>, vector<1x8x32xf32>,
    return
  }
  func.func @transform_0(%arg0: i32, %arg1: i32) -> (i32, i32, i32) {
    %c0_i32 = arith.constant 0 : i32
    %c0_i32_0 = arith.constant 0 : i32
    return %arg0, %arg1, %c0_i32 : i32, i32, i32
  }
  func.func @transform_1(%arg0: i32, %arg1: i32) -> (i32, i32, i32) {
    %c0_i32 = arith.constant 0 : i32
    %c0_i32_0 = arith.constant 0 : i32
    %c0_i32_1 = arith.constant 0 : i32
    return %arg0, %c0_i32, %c0_i32_0 : i32, i32, i32
  }
  func.func @transform_2(%arg0: i32, %arg1: i32) -> (i32, i32) {
    %c0_i32 = arith.constant 0 : i32
    %c0_i32_0 = arith.constant 0 : i32
    %c0_i32_1 = arith.constant 0 : i32
    return %c0_i32, %c0_i32_0 : i32, i32
  }
  func.func @transform_3(%arg0: i32, %arg1: i32) -> (i32, i32) {
    %c0_i32 = arith.constant 0 : i32
    %c0_i32_0 = arith.constant 0 : i32
    %c0_i32_1 = arith.constant 0 : i32
    return %c0_i32, %c0_i32_0 : i32, i32
  }
  func.func @transform_4(%arg0: i32, %arg1: i32) -> (i32, i32) {
    %c0_i32 = arith.constant 0 : i32
    %c0_i32_0 = arith.constant 0 : i32
    %c0_i32_1 = arith.constant 0 : i32
    return %c0_i32, %c0_i32_0 : i32, i32
  }
  func.func @transform_5(%arg0: i32, %arg1: i32) -> (i32, i32) {
    %c0_i32 = arith.constant 0 : i32
    %c0_i32_0 = arith.constant 0 : i32
    %c0_i32_1 = arith.constant 0 : i32
    return %c0_i32, %c0_i32_0 : i32, i32
  }
  func.func @transform_6(%arg0: i32, %arg1: i32) -> (i32, i32) {
    %c0_i32 = arith.constant 0 : i32
    %c0_i32_0 = arith.constant 0 : i32
    %c0_i32_1 = arith.constant 0 : i32
    return %c0_i32, %c0_i32_0 : i32, i32
  }
  func.func @transform_7(%arg0: i32, %arg1: i32) -> (i32, i32) {
    %c0_i32 = arith.constant 0 : i32
    %c0_i32_0 = arith.constant 0 : i32
    %c0_i32_1 = arith.constant 0 : i32
    return %c0_i32, %c0_i32_0 : i32, i32
  }
  func.func @transform_8(%arg0: i32, %arg1: i32) -> (i32, i32) {
    %c0_i32 = arith.constant 0 : i32
    %c0_i32_0 = arith.constant 0 : i32
    %c0_i32_1 = arith.constant 0 : i32
    return %c0_i32, %c0_i32_0 : i32, i32
  }
  func.func @transform_9(%arg0: i32, %arg1: i32) -> (i32, i32) {
    %c0_i32 = arith.constant 0 : i32
    %c0_i32_0 = arith.constant 0 : i32
    %c0_i32_1 = arith.constant 0 : i32
    return %c0_i32, %c0_i32_0 : i32, i32
  }
  func.func @transform_10(%arg0: i32, %arg1: i32) -> (i32, i32, i32) {
    %c0_i32 = arith.constant 0 : i32
    %c0_i32_0 = arith.constant 0 : i32
    return %arg0, %arg1, %c0_i32 : i32, i32, i32
  }
  func.func @transform_11(%arg0: i32, %arg1: i32) -> (i32, i32, i32, i32) {
    %c0_i32 = arith.constant 0 : i32
    %c0_i32_0 = arith.constant 0 : i32
    %c0_i32_1 = arith.constant 0 : i32
    return %arg0, %c0_i32, %arg1, %c0_i32_0 : i32, i32, i32, i32
  }
}

</mosaic_0001>

<llo_original>
// kernel: tpu_custom_call.1
$region0: #{tpu_custom_call.1}
  #allocation0 [shape = 'u32[]', space=smem, size = 0x4, offset = 0x4, fixed_abs, tag = 'smem constant byte address 0x4 - core index']
  #allocation1 [shape = 'u32[144,128]{1,0:T(1,128)}', space=vmem, size = 0x12000, scoped, tag = 'internal scratch']
  #allocation2 [shape = 'bf16[4,8,8]{2,1,0:T(8,128)(2,1)}', space=vmem, size = 0x2000, scoped, tag = 'scratch operand']
  #allocation3 [shape = 'bf16[4,8,8]{2,1,0:T(8,128)(2,1)}', space=vmem, size = 0x2000, scoped, tag = 'scratch operand']
  #allocation4 [shape = 'bf16[4,8,8]{2,1,0:T(8,128)(2,1)}', space=vmem, size = 0x2000, scoped, tag = 'scratch operand']
  #allocation5 [shape = 'bf16[8,32]{1,0:T(8,128)(2,1)}', space=vmem, size = 0x800, scoped, tag = 'scratch operand']
  %s0 = inlined_call_operand.hbm [shape: bf16[2,8,32], index: 0, kind: input, shape index: {}]
  %s1 = inlined_call_operand.hbm [shape: bf16[2,8,32], index: 1, kind: input, shape index: {}]
  %s2 = inlined_call_operand.hbm [shape: bf16[32,32], index: 2, kind: input, shape index: {}]
  %s3 = inlined_call_operand.vmem [shape: f32[1,32], index: 3, kind: input, shape index: {}]
  %s4 = inlined_call_operand.hbm [shape: bf16[32,32], index: 4, kind: input, shape index: {}]
  %s5 = inlined_call_operand.vmem [shape: f32[1,32], index: 5, kind: input, shape index: {}]
  %s6 = inlined_call_operand.vmem [shape: bf16[32,32], index: 6, kind: input, shape index: {}]
  %s7 = inlined_call_operand.vmem [shape: f32[1,32], index: 7, kind: input, shape index: {}]
  %s8 = inlined_call_operand.hbm [shape: bf16[32,32], index: 8, kind: input, shape index: {}]
  %s9 = inlined_call_operand.vmem [shape: f32[1,32], index: 9, kind: input, shape index: {}]
  %s10 = inlined_call_operand.hbm [shape: f32[2,8,32], index: 10, kind: output, shape index: {0}]
  %s11 = inlined_call_operand.hbm [shape: f32[2,4,8,8], index: 11, kind: output, shape index: {1}]
  %12 = xla_tuple %s10, %s11
  %s13 = sld [smem:[#allocation0]]
  $region105: #{tpu_custom_call.1} parent=0
    _
  %s15 = ssub.s32 1, %s13
  %s16 = scalar_select 0, %s15, %s13
  $region1: #{tpu_custom_call.1} parent=0
    #allocation6 [shape = 'u8[4096]{0}', space=vmem, size = 0x1000, scoped, tag = 'input window, operand 0']
    #allocation7 [shape = 's32[2]{0}', space=sflag, size = 0x8, scoped, tag = 'scoped memory for tpu_custom_call.1']
    #allocation8 [shape = 's32[2]{0}', space=sflag, size = 0x8, scoped, tag = 'scoped memory for tpu_custom_call.1']
    #allocation9 [shape = 'u8[4096]{0}', space=vmem, size = 0x1000, scoped, tag = 'input window, operand 1']
    #allocation10 [shape = 's32[2]{0}', space=sflag, size = 0x8, scoped, tag = 'scoped memory for tpu_custom_call.1']
    #allocation11 [shape = 'u8[8192]{0}', space=vmem, size = 0x2000, scoped, tag = 'input window, operand 2, single buffered']
    #allocation12 [shape = 'u8[8192]{0}', space=vmem, size = 0x2000, scoped, tag = 'input window, operand 4, single buffered']
    #allocation13 [shape = 's32[1]{0}', space=sflag, size = 0x4, scoped, tag = 'scoped memory for tpu_custom_call.1']
    #allocation14 [shape = 'u8[8192]{0}', space=vmem, size = 0x2000, scoped, tag = 'input window, operand 8, single buffered']
    #allocation15 [shape = 'u8[8192]{0}', space=vmem, size = 0x2000, scoped, tag = 'output window, operand 0']
    #allocation16 [shape = 'u8[32768]{0}', space=vmem, size = 0x8000, scoped, tag = 'output window, operand 1']
    #allocation17 [shape = 's32[2]{0}', space=sflag, size = 0x8, scoped, tag = 'scoped memory for tpu_custom_call.1']
    %17 = vsyncpa [#allocation7], 0
    %s18 = scalar_lea.sflag [#allocation7], 1
    %19 = vsyncpa %s18, 0
    %20 = vsyncpa [#allocation10], 0
    %s21 = scalar_lea.sflag [#allocation10], 1
    %22 = vsyncpa %s21, 0
    %23 = vsyncpa [#allocation13], 0
    %24 = vsyncpa [#allocation8], 0
    %s25 = scalar_lea.sflag [#allocation8], 1
    %26 = vsyncpa %s25, 0
    %27 = vsyncpa [#allocation17], 0
    %s28 = scalar_lea.sflag [#allocation17], 1
    %29 = vsyncpa %s28, 0
    loop: start=0, step=1, limit=4
    $region2: #{tpu_custom_call.1} parent=1 // loop_pre_header
      _
    $region3: #{tpu_custom_call.1} parent=1 // loop_header
      %s31 = sphi 0, %s35
      %p32 = scmp.ge.s32.totalorder %s31, 4
      %s38 = sphi 0, %s50
      %s39 = sphi 0, %s46
      %s40 = sphi 0, %s38
      %s41 = sphi 0, %s39
      %s42 = sphi 0, %s40
      %s43 = sphi 0, %s41
      %s55 = sphi 0, %s57
      %s58 = sphi 0, %s55
      %s59 = sphi 0, %s58
      %s75 = sphi 0, %s59
      %s81 = sphi 0, %s83
      %s84 = sphi 0, %s81
      %s85 = sphi 0, %s84
      %s101 = sphi 0, %s85
      %s105 = sphi 0, %s105
      %s107 = sphi 0, %s105
      %s108 = sphi 0, %s107
      %s122 = sphi 0, %s108
      %s126 = sphi 0, %s126
      %s128 = sphi 0, %s126
      %s129 = sphi 0, %s128
      %s143 = sphi 0, %s129
      %s147 = sphi 0, %s147
      %s149 = sphi 0, %s147
      %s150 = sphi 0, %s149
      %s164 = sphi 0, %s150
      %s168 = sphi 0, %s168
      %s170 = sphi 0, %s168
      %s171 = sphi 0, %s170
      %s185 = sphi 0, %s171
      %s189 = sphi 0, %s189
      %s191 = sphi 0, %s189
      %s192 = sphi 0, %s191
      %s206 = sphi 0, %s192
      %s210 = sphi 0, %s210
      %s212 = sphi 0, %s210
      %s213 = sphi 0, %s212
      %s227 = sphi 0, %s213
      %s231 = sphi 0, %s231
      %s233 = sphi 0, %s231
      %s234 = sphi 0, %s233
      %s248 = sphi 0, %s234
      %s252 = sphi 0, %s252
      %s254 = sphi 0, %s252
      %s255 = sphi 0, %s254
      %s269 = sphi 0, %s255
      %s277 = sphi 0, %s279
      %s280 = sphi 0, %s277
      %s281 = sphi 0, %s280
      %s297 = sphi 0, %s281
      %s305 = sphi 0, %s307
      %s308 = sphi 0, %s305
      %s309 = sphi 0, %s308
      %s325 = sphi 0, %s309
    $region4: #{tpu_custom_call.1} parent=1 // loop_header_branch
      %34 = sbr.rel (%p32) target = $region8
    $region5: #{tpu_custom_call.1} parent=1 // loop_body
      %s36 = ssub.s32 %s31, 1
      %s37 = ssub.s32 %s31, 2
      %s44 = sadd.s32 1, %s39
      %p45 = scmp.ge.s32.totalorder %s44, 1
      %s46 = scalar_select %p45, 0, %s44
      %s47 = sadd.s32 1, %s38
      %s48 = scalar_select %p45, %s47, %s38
      %p49 = scmp.ge.s32.totalorder %s48, 2
      %s50 = scalar_select %p49, 0, %s48
      %s51 = ssub.s32 %s38, %s50
      %s52 = ssub.s32 %s39, %s46
      %s53 = sor.u32 %s51, %s52
      %p54 = scmp.eq.s32.totalorder %s53, 0
      %s56 = sadd.s32 %s55, 1
      %s57 = scalar_select %p54, %s55, %s56
      %p60 = pneg %p54
      %p61 = scmp.eq.s32.totalorder %s31, 1
      %p62 = por %p60, %p61
      %p63 = scmp.ne.s32.totalorder %s55, %s58
      %p64 = scmp.eq.s32.totalorder %s31, 0
      %p65 = por %p63, %p64
      %p66 = scmp.ne.s32.totalorder %s55, %s58
      %p67 = scmp.eq.s32.totalorder %s36, 1
      %p68 = por %p66, %p67
      %p69 = scmp.ne.s32.totalorder %s58, %s59
      %p70 = scmp.eq.s32.totalorder %s36, 0
      %p71 = por %p69, %p70
      %p72 = scmp.ne.s32.totalorder %s58, %s59
      %p73 = scmp.eq.s32.totalorder %s37, 1
      %p74 = por %p72, %p73
      %p76 = scmp.ne.s32.totalorder %s59, %s75
      %p77 = scmp.eq.s32.totalorder %s37, 0
      %p78 = por %p76, %p77
      %s79 = ssub.s32 %s38, %s50
      %p80 = scmp.eq.s32.totalorder %s79, 0
      %s82 = sadd.s32 %s81, 1
      %s83 = scalar_select %p80, %s81, %s82
      %p86 = pneg %p80
      %p87 = scmp.eq.s32.totalorder %s31, 1
      %p88 = por %p86, %p87
      %p89 = scmp.ne.s32.totalorder %s81, %s84
      %p90 = scmp.eq.s32.totalorder %s31, 0
      %p91 = por %p89, %p90
      %p92 = scmp.ne.s32.totalorder %s81, %s84
      %p93 = scmp.eq.s32.totalorder %s36, 1
      %p94 = por %p92, %p93
      %p95 = scmp.ne.s32.totalorder %s84, %s85
      %p96 = scmp.eq.s32.totalorder %s36, 0
      %p97 = por %p95, %p96
      %p98 = scmp.ne.s32.totalorder %s84, %s85
      %p99 = scmp.eq.s32.totalorder %s37, 1
      %p100 = por %p98, %p99
      %p102 = scmp.ne.s32.totalorder %s85, %s101
      %p103 = scmp.eq.s32.totalorder %s37, 0
      %p104 = por %p102, %p103
      %s106 = sadd.s32 %s105, 1
      %p109 = scmp.eq.s32.totalorder %s31, 1
      %p110 = scmp.ne.s32.totalorder %s105, %s107
      %p111 = scmp.eq.s32.totalorder %s31, 0
      %p112 = por %p110, %p111
      %p113 = scmp.ne.s32.totalorder %s105, %s107
      %p114 = scmp.eq.s32.totalorder %s36, 1
      %p115 = por %p113, %p114
      %p116 = scmp.ne.s32.totalorder %s107, %s108
      %p117 = scmp.eq.s32.totalorder %s36, 0
      %p118 = por %p116, %p117
      %p119 = scmp.ne.s32.totalorder %s107, %s108
      %p120 = scmp.eq.s32.totalorder %s37, 1
      %p121 = por %p119, %p120
      %p123 = scmp.ne.s32.totalorder %s108, %s122
      %p124 = scmp.eq.s32.totalorder %s37, 0
      %p125 = por %p123, %p124
      %s127 = sadd.s32 %s126, 1
      %p130 = scmp.eq.s32.totalorder %s31, 1
      %p131 = scmp.ne.s32.totalorder %s126, %s128
      %p132 = scmp.eq.s32.totalorder %s31, 0
      %p133 = por %p131, %p132
      %p134 = scmp.ne.s32.totalorder %s126, %s128
      %p135 = scmp.eq.s32.totalorder %s36, 1
      %p136 = por %p134, %p135
      %p137 = scmp.ne.s32.totalorder %s128, %s129
      %p138 = scmp.eq.s32.totalorder %s36, 0
      %p139 = por %p137, %p138
      %p140 = scmp.ne.s32.totalorder %s128, %s129
      %p141 = scmp.eq.s32.totalorder %s37, 1
      %p142 = por %p140, %p141
      %p144 = scmp.ne.s32.totalorder %s129, %s143
      %p145 = scmp.eq.s32.totalorder %s37, 0
      %p146 = por %p144, %p145
      %s148 = sadd.s32 %s147, 1
      %p151 = scmp.eq.s32.totalorder %s31, 1
      %p152 = scmp.ne.s32.totalorder %s147, %s149
      %p153 = scmp.eq.s32.totalorder %s31, 0
      %p154 = por %p152, %p153
      %p155 = scmp.ne.s32.totalorder %s147, %s149
      %p156 = scmp.eq.s32.totalorder %s36, 1
      %p157 = por %p155, %p156
      %p158 = scmp.ne.s32.totalorder %s149, %s150
      %p159 = scmp.eq.s32.totalorder %s36, 0
      %p160 = por %p158, %p159
      %p161 = scmp.ne.s32.totalorder %s149, %s150
      %p162 = scmp.eq.s32.totalorder %s37, 1
      %p163 = por %p161, %p162
      %p165 = scmp.ne.s32.totalorder %s150, %s164
      %p166 = scmp.eq.s32.totalorder %s37, 0
      %p167 = por %p165, %p166
      %s169 = sadd.s32 %s168, 1
      %p172 = scmp.eq.s32.totalorder %s31, 1
      %p173 = scmp.ne.s32.totalorder %s168, %s170
      %p174 = scmp.eq.s32.totalorder %s31, 0
      %p175 = por %p173, %p174
      %p176 = scmp.ne.s32.totalorder %s168, %s170
      %p177 = scmp.eq.s32.totalorder %s36, 1
      %p178 = por %p176, %p177
      %p179 = scmp.ne.s32.totalorder %s170, %s171
      %p180 = scmp.eq.s32.totalorder %s36, 0
      %p181 = por %p179, %p180
      %p182 = scmp.ne.s32.totalorder %s170, %s171
      %p183 = scmp.eq.s32.totalorder %s37, 1
      %p184 = por %p182, %p183
      %p186 = scmp.ne.s32.totalorder %s171, %s185
      %p187 = scmp.eq.s32.totalorder %s37, 0
      %p188 = por %p186, %p187
      %s190 = sadd.s32 %s189, 1
      %p193 = scmp.eq.s32.totalorder %s31, 1
      %p194 = scmp.ne.s32.totalorder %s189, %s191
      %p195 = scmp.eq.s32.totalorder %s31, 0
      %p196 = por %p194, %p195
      %p197 = scmp.ne.s32.totalorder %s189, %s191
      %p198 = scmp.eq.s32.totalorder %s36, 1
      %p199 = por %p197, %p198
      %p200 = scmp.ne.s32.totalorder %s191, %s192
      %p201 = scmp.eq.s32.totalorder %s36, 0
      %p202 = por %p200, %p201
      %p203 = scmp.ne.s32.totalorder %s191, %s192
      %p204 = scmp.eq.s32.totalorder %s37, 1
      %p205 = por %p203, %p204
      %p207 = scmp.ne.s32.totalorder %s192, %s206
      %p208 = scmp.eq.s32.totalorder %s37, 0
      %p209 = por %p207, %p208
      %s211 = sadd.s32 %s210, 1
      %p214 = scmp.eq.s32.totalorder %s31, 1
      %p215 = scmp.ne.s32.totalorder %s210, %s212
      %p216 = scmp.eq.s32.totalorder %s31, 0
      %p217 = por %p215, %p216
      %p218 = scmp.ne.s32.totalorder %s210, %s212
      %p219 = scmp.eq.s32.totalorder %s36, 1
      %p220 = por %p218, %p219
      %p221 = scmp.ne.s32.totalorder %s212, %s213
      %p222 = scmp.eq.s32.totalorder %s36, 0
      %p223 = por %p221, %p222
      %p224 = scmp.ne.s32.totalorder %s212, %s213
      %p225 = scmp.eq.s32.totalorder %s37, 1
      %p226 = por %p224, %p225
      %p228 = scmp.ne.s32.totalorder %s213, %s227
      %p229 = scmp.eq.s32.totalorder %s37, 0
      %p230 = por %p228, %p229
      %s232 = sadd.s32 %s231, 1
      %p235 = scmp.eq.s32.totalorder %s31, 1
      %p236 = scmp.ne.s32.totalorder %s231, %s233
      %p237 = scmp.eq.s32.totalorder %s31, 0
      %p238 = por %p236, %p237
      %p239 = scmp.ne.s32.totalorder %s231, %s233
      %p240 = scmp.eq.s32.totalorder %s36, 1
      %p241 = por %p239, %p240
      %p242 = scmp.ne.s32.totalorder %s233, %s234
      %p243 = scmp.eq.s32.totalorder %s36, 0
      %p244 = por %p242, %p243
      %p245 = scmp.ne.s32.totalorder %s233, %s234
      %p246 = scmp.eq.s32.totalorder %s37, 1
      %p247 = por %p245, %p246
      %p249 = scmp.ne.s32.totalorder %s234, %s248
      %p250 = scmp.eq.s32.totalorder %s37, 0
      %p251 = por %p249, %p250
      %s253 = sadd.s32 %s252, 1
      %p256 = scmp.eq.s32.totalorder %s31, 1
      %p257 = scmp.ne.s32.totalorder %s252, %s254
      %p258 = scmp.eq.s32.totalorder %s31, 0
      %p259 = por %p257, %p258
      %p260 = scmp.ne.s32.totalorder %s252, %s254
      %p261 = scmp.eq.s32.totalorder %s36, 1
      %p262 = por %p260, %p261
      %p263 = scmp.ne.s32.totalorder %s254, %s255
      %p264 = scmp.eq.s32.totalorder %s36, 0
      %p265 = por %p263, %p264
      %p266 = scmp.ne.s32.totalorder %s254, %s255
      %p267 = scmp.eq.s32.totalorder %s37, 1
      %p268 = por %p266, %p267
      %p270 = scmp.ne.s32.totalorder %s255, %s269
      %p271 = scmp.eq.s32.totalorder %s37, 0
      %p272 = por %p270, %p271
      %s273 = ssub.s32 %s38, %s50
      %s274 = ssub.s32 %s39, %s46
      %s275 = sor.u32 %s273, %s274
      %p276 = scmp.eq.s32.totalorder %s275, 0
      %s278 = sadd.s32 %s277, 1
      %s279 = scalar_select %p276, %s277, %s278
      %p282 = pneg %p276
      %p283 = scmp.eq.s32.totalorder %s31, 1
      %p284 = por %p282, %p283
      %p285 = scmp.ne.s32.totalorder %s277, %s280
      %p286 = scmp.eq.s32.totalorder %s31, 0
      %p287 = por %p285, %p286
      %p288 = scmp.ne.s32.totalorder %s277, %s280
      %p289 = scmp.eq.s32.totalorder %s36, 1
      %p290 = por %p288, %p289
      %p291 = scmp.ne.s32.totalorder %s280, %s281
      %p292 = scmp.eq.s32.totalorder %s36, 0
      %p293 = por %p291, %p292
      %p294 = scmp.ne.s32.totalorder %s280, %s281
      %p295 = scmp.eq.s32.totalorder %s37, 1
      %p296 = por %p294, %p295
      %p298 = scmp.ne.s32.totalorder %s281, %s297
      %p299 = scmp.eq.s32.totalorder %s37, 0
      %p300 = por %p298, %p299
      %s301 = ssub.s32 %s38, %s50
      %s302 = ssub.s32 %s39, %s46
      %s303 = sor.u32 %s301, %s302
      %p304 = scmp.eq.s32.totalorder %s303, 0
      %s306 = sadd.s32 %s305, 1
      %s307 = scalar_select %p304, %s305, %s306
      %p310 = pneg %p304
      %p311 = scmp.eq.s32.totalorder %s31, 1
      %p312 = por %p310, %p311
      %p313 = scmp.ne.s32.totalorder %s305, %s308
      %p314 = scmp.eq.s32.totalorder %s31, 0
      %p315 = por %p313, %p314
      %p316 = scmp.ne.s32.totalorder %s305, %s308
      %p317 = scmp.eq.s32.totalorder %s36, 1
      %p318 = por %p316, %p317
      %p319 = scmp.ne.s32.totalorder %s308, %s309
      %p320 = scmp.eq.s32.totalorder %s36, 0
      %p321 = por %p319, %p320
      %p322 = scmp.ne.s32.totalorder %s308, %s309
      %p323 = scmp.eq.s32.totalorder %s37, 1
      %p324 = por %p322, %p323
      %p326 = scmp.ne.s32.totalorder %s309, %s325
      %p327 = scmp.eq.s32.totalorder %s37, 0
      %p328 = por %p326, %p327
      %p329 = scmp.le.s32.totalorder 1, %s31
      %p330 = scmp.lt.s32.totalorder %s31, 3
      %p331 = pnand %p329, %p330
      %p332 = pneg %p331
      // Predicated region
      $region9: #{tpu_custom_call.1} parent=5 // pred_check
        _
      $region10: #{tpu_custom_call.1} parent=5 // pred_check_branch
        %334 = sbr.rel (%p331) target = $region12
      $region11: #{tpu_custom_call.1} parent=5 // pred_region
        %s335 = ssub.s32 %s31, 1
        // Predicated region
        $region13: #{tpu_custom_call.1} parent=11 // pred_check
          %p336 = pneg %p118
        $region14: #{tpu_custom_call.1} parent=11 // pred_check_branch
          %338 = sbr.rel (%p336) target = $region16
        $region15: #{tpu_custom_call.1} parent=11 // pred_region
          %s340 = ssub.s32 256, 256
          %341 = vsyncadd [#allocation10], %s340
          %s342 = sshll.u32 [#allocation11], 4
          %s343 = int_to_ptr.vmem [resolvable:$true] %s342
          %348 = dma.hbm_to_vmem [thread:$0]  %s2, 256, %s343, [#allocation10], 64, 64, 4
        $region16: #{tpu_custom_call.1} parent=11 // pred_fallthru
          _
        // Predicated region
        $region17: #{tpu_custom_call.1} parent=11 // pred_check
          %p349 = pneg %p139
        $region18: #{tpu_custom_call.1} parent=11 // pred_check_branch
          %351 = sbr.rel (%p349) target = $region20
        $region19: #{tpu_custom_call.1} parent=11 // pred_region
          _
        $region20: #{tpu_custom_call.1} parent=11 // pred_fallthru
          _
        // Predicated region
        $region21: #{tpu_custom_call.1} parent=11 // pred_check
          %p352 = pneg %p160
        $region22: #{tpu_custom_call.1} parent=11 // pred_check_branch
          %354 = sbr.rel (%p352) target = $region24
        $region23: #{tpu_custom_call.1} parent=11 // pred_region
          %s356 = ssub.s32 256, 256
          %357 = vsyncadd [#allocation13], %s356
          %s358 = sshll.u32 [#allocation12], 4
          %s359 = int_to_ptr.vmem [resolvable:$true] %s358
          %364 = dma.hbm_to_vmem [thread:$0]  %s4, 256, %s359, [#allocation13], 64, 64, 4
        $region24: #{tpu_custom_call.1} parent=11 // pred_fallthru
          _
        // Predicated region
        $region25: #{tpu_custom_call.1} parent=11 // pred_check
          %p365 = pneg %p181
        $region26: #{tpu_custom_call.1} parent=11 // pred_check_branch
          %367 = sbr.rel (%p365) target = $region28
        $region27: #{tpu_custom_call.1} parent=11 // pred_region
          _
        $region28: #{tpu_custom_call.1} parent=11 // pred_fallthru
          _
        // Predicated region
        $region29: #{tpu_custom_call.1} parent=11 // pred_check
          %p368 = pneg %p202
        $region30: #{tpu_custom_call.1} parent=11 // pred_check_branch
          %370 = sbr.rel (%p368) target = $region32
        $region31: #{tpu_custom_call.1} parent=11 // pred_region
          _
        $region32: #{tpu_custom_call.1} parent=11 // pred_fallthru
          _
        // Predicated region
        $region33: #{tpu_custom_call.1} parent=11 // pred_check
          %p371 = pneg %p223
        $region34: #{tpu_custom_call.1} parent=11 // pred_check_branch
          %373 = sbr.rel (%p371) target = $region36
        $region35: #{tpu_custom_call.1} parent=11 // pred_region
          _
        $region36: #{tpu_custom_call.1} parent=11 // pred_fallthru
          _
        // Predicated region
        $region37: #{tpu_custom_call.1} parent=11 // pred_check
          %p374 = pneg %p244
        $region38: #{tpu_custom_call.1} parent=11 // pred_check_branch
          %376 = sbr.rel (%p374) target = $region40
        $region39: #{tpu_custom_call.1} parent=11 // pred_region
          %s378 = ssub.s32 256, 256
          %379 = vsyncadd [#allocation13], %s378
          %s380 = sshll.u32 [#allocation14], 4
          %s381 = int_to_ptr.vmem [resolvable:$true] %s380
          %386 = dma.hbm_to_vmem [thread:$0]  %s8, 256, %s381, [#allocation13], 64, 64, 4
        $region40: #{tpu_custom_call.1} parent=11 // pred_fallthru
          _
        // Predicated region
        $region41: #{tpu_custom_call.1} parent=11 // pred_check
          %p387 = pneg %p265
        $region42: #{tpu_custom_call.1} parent=11 // pred_check_branch
          %389 = sbr.rel (%p387) target = $region44
        $region43: #{tpu_custom_call.1} parent=11 // pred_region
          _
        $region44: #{tpu_custom_call.1} parent=11 // pred_fallthru
          _
      $region12: #{tpu_custom_call.1} parent=5 // pred_fallthru
        _
      %p390 = scmp.lt.s32.totalorder %s31, 2
      // Predicated region
      $region45: #{tpu_custom_call.1} parent=5 // pred_check
        %p391 = pneg %p390
      $region46: #{tpu_custom_call.1} parent=5 // pred_check_branch
        %393 = sbr.rel (%p391) target = $region48
      $region47: #{tpu_custom_call.1} parent=5 // pred_region
        // Predicated region
        $region49: #{tpu_custom_call.1} parent=47 // pred_check
          %p394 = pneg %p65
        $region50: #{tpu_custom_call.1} parent=47 // pred_check_branch
          %396 = sbr.rel (%p394) target = $region52
        $region51: #{tpu_custom_call.1} parent=47 // pred_region
          %s397 = sand.u32 %s55, 1
          %s398 = scalar_lea.sflag [#allocation7], %s397
          %s399 = sand.u32 %s55, 1
          %s400 = smul.addr %s399, 4
          %s401 = scalar_lea.vmem [#allocation6], %s400
          %s403 = ssub.s32 64, 64
          %404 = vsyncadd %s398, %s403
          %s405 = sadd.s32 %s39, %s38
          %s406 = smul.addr %s405, 64
          %s407 = scalar_lea.hbm %s0, %s406
          %s409 = sshll.u32 %s401, 4
          %s410 = int_to_ptr.vmem [resolvable:$true] %s409
          %412 = dma.hbm_to_vmem [thread:$0]  %s407, 64, %s410, %s398
        $region52: #{tpu_custom_call.1} parent=47 // pred_fallthru
          _
        // Predicated region
        $region53: #{tpu_custom_call.1} parent=47 // pred_check
          %p413 = pneg %p91
        $region54: #{tpu_custom_call.1} parent=47 // pred_check_branch
          %415 = sbr.rel (%p413) target = $region56
        $region55: #{tpu_custom_call.1} parent=47 // pred_region
          %s416 = sand.u32 %s31, 1
          %s417 = scalar_lea.sflag [#allocation10], %s416
          %s418 = sand.u32 %s81, 1
          %s419 = smul.addr %s418, 4
          %s420 = scalar_lea.vmem [#allocation9], %s419
          %s422 = ssub.s32 64, 64
          %423 = vsyncadd %s417, %s422
          %s424 = smul.addr %s38, 64
          %s425 = scalar_lea.hbm %s1, %s424
          %s427 = sshll.u32 %s420, 4
          %s428 = int_to_ptr.vmem [resolvable:$true] %s427
          %430 = dma.hbm_to_vmem [thread:$0]  %s425, 64, %s428, %s417
        $region56: #{tpu_custom_call.1} parent=47 // pred_fallthru
          _
      $region48: #{tpu_custom_call.1} parent=5 // pred_fallthru
        _
      %p431 = scmp.le.s32.totalorder 1, %s31
      %p432 = scmp.lt.s32.totalorder %s31, 3
      %p433 = pnand %p431, %p432
      %p434 = pneg %p433
      // Predicated region
      $region57: #{tpu_custom_call.1} parent=5 // pred_check
        _
      $region58: #{tpu_custom_call.1} parent=5 // pred_check_branch
        %436 = sbr.rel (%p433) target = $region60
      $region59: #{tpu_custom_call.1} parent=5 // pred_region
        %s437 = ssub.s32 %s31, 1
        %s438 = sand.u32 %s58, 1
        %s439 = scalar_lea.sflag [#allocation7], %s438
        %s440 = sand.u32 %s58, 1
        %s441 = smul.addr %s440, 4
        %s442 = scalar_lea.vmem [#allocation6], %s441
        // Predicated region
        $region61: #{tpu_custom_call.1} parent=59 // pred_check
          %p443 = pneg %p71
        $region62: #{tpu_custom_call.1} parent=59 // pred_check_branch
          %445 = sbr.rel (%p443) target = $region64
        $region63: #{tpu_custom_call.1} parent=59 // pred_region
          %446 = dma.done %s439, 64
        $region64: #{tpu_custom_call.1} parent=59 // pred_fallthru
          _
        %s447 = sand.u32 %s36, 1
        %s448 = scalar_lea.sflag [#allocation10], %s447
        %s449 = sand.u32 %s84, 1
        %s450 = smul.addr %s449, 4
        %s451 = scalar_lea.vmem [#allocation9], %s450
        // Predicated region
        $region65: #{tpu_custom_call.1} parent=59 // pred_check
          %p452 = pneg %p97
        $region66: #{tpu_custom_call.1} parent=59 // pred_check_branch
          %454 = sbr.rel (%p452) target = $region68
        $region67: #{tpu_custom_call.1} parent=59 // pred_region
          %455 = dma.done %s448, 64
        $region68: #{tpu_custom_call.1} parent=59 // pred_fallthru
          _
        // Predicated region
        $region69: #{tpu_custom_call.1} parent=59 // pred_check
          %p456 = pneg %p118
        $region70: #{tpu_custom_call.1} parent=59 // pred_check_branch
          %458 = sbr.rel (%p456) target = $region72
        $region71: #{tpu_custom_call.1} parent=59 // pred_region
          %459 = dma.done [#allocation10], 256
        $region72: #{tpu_custom_call.1} parent=59 // pred_fallthru
          _
        // Predicated region
        $region73: #{tpu_custom_call.1} parent=59 // pred_check
          %p460 = pneg %p160
        $region74: #{tpu_custom_call.1} parent=59 // pred_check_branch
          %462 = sbr.rel (%p460) target = $region76
        $region75: #{tpu_custom_call.1} parent=59 // pred_region
          %463 = dma.done [#allocation13], 256
        $region76: #{tpu_custom_call.1} parent=59 // pred_fallthru
          _
        // Predicated region
        $region77: #{tpu_custom_call.1} parent=59 // pred_check
          %p464 = pneg %p244
        $region78: #{tpu_custom_call.1} parent=59 // pred_check_branch
          %466 = sbr.rel (%p464) target = $region80
        $region79: #{tpu_custom_call.1} parent=59 // pred_region
          %467 = dma.done [#allocation13], 256
        $region80: #{tpu_custom_call.1} parent=59 // pred_fallthru
          _
        %s468 = sand.u32 %s58, 1
        %s469 = scalar_lea.sflag [#allocation7], %s468
        %s470 = sand.u32 %s58, 1
        %s471 = smul.addr %s470, 4
        %s472 = scalar_lea.vmem [#allocation6], %s471
        %p473 = pneg %p71
        %p474 = pneg %p68
        %s475 = sand.u32 %s36, 1
        %s476 = scalar_lea.sflag [#allocation10], %s475
        %s477 = sand.u32 %s84, 1
        %s478 = smul.addr %s477, 4
        %s479 = scalar_lea.vmem [#allocation9], %s478
        %p480 = pneg %p97
        %p481 = pneg %p94
        %p482 = pneg %p118
        %p483 = pneg %p115
        %p484 = pneg %p139
        %p485 = pneg %p136
        %p486 = pneg %p160
        %p487 = pneg %p157
        %p488 = pneg %p181
        %p489 = pneg %p178
        %p490 = pneg %p202
        %p491 = pneg %p199
        %p492 = pneg %p223
        %p493 = pneg %p220
        %p494 = pneg %p244
        %p495 = pneg %p241
        %p496 = pneg %p265
        %p497 = pneg %p262
        %p498 = pneg %p293
        %p499 = pneg %p290
        %s500 = sand.u32 %s280, 1
        %s501 = scalar_lea.sflag [#allocation8], %s500
        %s502 = sand.u32 %s280, 1
        %s503 = smul.addr %s502, 8
        %s504 = scalar_lea.vmem [#allocation15], %s503
        %p505 = pneg %p321
        %p506 = pneg %p318
        %s507 = sand.u32 %s308, 1
        %s508 = scalar_lea.sflag [#allocation17], %s507
        %s509 = sand.u32 %s308, 1
        %s510 = smul.addr %s509, 32
        %s511 = scalar_lea.vmem [#allocation16], %s510
        %p513 = scmp.eq.s32.totalorder %s41, 0
        // Predicated region
        $region81: #{tpu_custom_call.1} parent=59 // pred_check
          %p514 = pneg %p513
        $region82: #{tpu_custom_call.1} parent=59 // pred_check_branch
          %516 = sbr.rel (%p514) target = $region84
        $region83: #{tpu_custom_call.1} parent=59 // pred_region
          %v517 = vld [vmem:[%s451] sm:$0xf]
          %v518 = vld [vmem:[#allocation12] sm:$0xf]
          %v519 = vld [vmem:[#allocation12 + $0x4] sm:$0xf]
          %v520 = vld [vmem:[#allocation12 + $0x8] sm:$0xf]
          %v521 = vld [vmem:[#allocation12 + $0xc] sm:$0xf]
          %v522 = vld [vmem:[%s5] sm:$0x1]
          %v524 = vlaneseq
          %v525 = vshrl.u32 %v524, 7
          %v526 = vsub.s32 0, %v525
          %v527 = vrot.slane %v522, %v526
          %v533 = vunpack.c.l.b16 %v518
          %v534 = vunpack.c.l.b16 %v519
          %v535 = vunpack.c.l.b16 %v520
          %v536 = vunpack.c.l.b16 %v521
          %v537 = vpack.c.b16 %v534, %v533
          %v538 = vpack.c.b16 %v536, %v535
          %vm541 = vcmask 261120
          %v543 = vsel %vm541, %v517, 0
          %545 = vmatprep.subr.bf16.mxu0 0
          %546 = vmatpush1.bf16.msra.mxu0 %v537
          %547 = vmatprep.subr.bf16.mxu0 0
          %548 = vmatpush1.bf16.msra.mxu0 %v538
          %549 = vmatprep.subr.bf16.mxu0 0
          %550 = vmatpush1.bf16.msra.mxu0 0
          %551 = vmatprep.subr.bf16.mxu0 0
          %552 = vmatpush1.bf16.msra.mxu0 0
          %553 = vmatprep.subr.bf16.mxu0 0
          %554 = vmatpush1.bf16.msra.mxu0 0
          %555 = vmatprep.subr.bf16.mxu0 0
          %556 = vmatpush1.bf16.msra.mxu0 0
          %557 = vmatprep.subr.bf16.mxu0 0
          %558 = vmatpush1.bf16.msra.mxu0 0
          %559 = vmatprep.subr.bf16.mxu0 0
          %560 = vmatpush1.bf16.msra.mxu0 0
          %561 = vmatprep.subr.bf16.mxu0 0
          %562 = vmatpush1.bf16.msra.mxu0 0
          %563 = vmatprep.subr.bf16.mxu0 0
          %564 = vmatpush1.bf16.msra.mxu0 0
          %565 = vmatprep.subr.bf16.mxu0 0
          %566 = vmatpush1.bf16.msra.mxu0 0
          %567 = vmatprep.subr.bf16.mxu0 0
          %568 = vmatpush1.bf16.msra.mxu0 0
          %569 = vmatprep.subr.bf16.mxu0 0
          %570 = vmatpush1.bf16.msra.mxu0 0
          %571 = vmatprep.subr.bf16.mxu0 0
          %572 = vmatpush1.bf16.msra.mxu0 0
          %573 = vmatprep.subr.bf16.mxu0 0
          %574 = vmatpush1.bf16.msra.mxu0 0
          %575 = vmatprep.subr.bf16.mxu0 0
          %576 = vmatpush1.bf16.msra.mxu0 0
          %577 = vmatprep.mubr.bf16.mxu0 0
          %578 = vmatmul.mubr.bf16.gmra.mrb[0].mxu0 %v543
          %v579 = vpop.f32.mrb[0].mxu0
          %v580 = vadd.f32 %v527, %v579
          %v581 = vpop.f32.mrb[0].mxu0
          %v582 = vpop.f32.mrb[0].mxu0
          %v583 = vpop.f32.mrb[0].mxu0
          %584 = vdwg.mxu0
          %v585 = vpack.c.bf16 %v580, %v580
          %v586 = vld [vmem:[%s6] sm:$0xf]
          %v587 = vld [vmem:[%s6 + $0x4] sm:$0xf]
          %v588 = vld [vmem:[%s6 + $0x8] sm:$0xf]
          %v589 = vld [vmem:[%s6 + $0xc] sm:$0xf]
          %v590 = vld [vmem:[%s7] sm:$0x1]
          %v592 = vlaneseq
          %v593 = vshrl.u32 %v592, 7
          %v594 = vsub.s32 0, %v593
          %v595 = vrot.slane %v590, %v594
          %v601 = vunpack.c.l.b16 %v586
          %v602 = vunpack.c.l.b16 %v587
          %v603 = vunpack.c.l.b16 %v588
          %v604 = vunpack.c.l.b16 %v589
          %v605 = vpack.c.b16 %v602, %v601
          %v606 = vpack.c.b16 %v604, %v603
          %609 = vmatprep.subr.bf16.mxu0 0
          %610 = vmatpush1.bf16.msra.mxu0 %v605
          %611 = vmatprep.subr.bf16.mxu0 0
          %612 = vmatpush1.bf16.msra.mxu0 %v606
          %613 = vmatprep.subr.bf16.mxu0 0
          %614 = vmatpush1.bf16.msra.mxu0 0
          %615 = vmatprep.subr.bf16.mxu0 0
          %616 = vmatpush1.bf16.msra.mxu0 0
          %617 = vmatprep.subr.bf16.mxu0 0
          %618 = vmatpush1.bf16.msra.mxu0 0
          %619 = vmatprep.subr.bf16.mxu0 0
          %620 = vmatpush1.bf16.msra.mxu0 0
          %621 = vmatprep.subr.bf16.mxu0 0
          %622 = vmatpush1.bf16.msra.mxu0 0
          %623 = vmatprep.subr.bf16.mxu0 0
          %624 = vmatpush1.bf16.msra.mxu0 0
          %625 = vmatprep.subr.bf16.mxu0 0
          %626 = vmatpush1.bf16.msra.mxu0 0
          %627 = vmatprep.subr.bf16.mxu0 0
          %628 = vmatpush1.bf16.msra.mxu0 0
          %629 = vmatprep.subr.bf16.mxu0 0
          %630 = vmatpush1.bf16.msra.mxu0 0
          %631 = vmatprep.subr.bf16.mxu0 0
          %632 = vmatpush1.bf16.msra.mxu0 0
          %633 = vmatprep.subr.bf16.mxu0 0
          %634 = vmatpush1.bf16.msra.mxu0 0
          %635 = vmatprep.subr.bf16.mxu0 0
          %636 = vmatpush1.bf16.msra.mxu0 0
          %637 = vmatprep.subr.bf16.mxu0 0
          %638 = vmatpush1.bf16.msra.mxu0 0
          %639 = vmatprep.subr.bf16.mxu0 0
          %640 = vmatpush1.bf16.msra.mxu0 0
          %641 = vmatprep.mubr.bf16.mxu0 0
          %642 = vmatmul.mubr.bf16.gmra.mrb[0].mxu0 %v543
          %v643 = vpop.f32.mrb[0].mxu0
          %v644 = vadd.f32 %v595, %v643
          %v645 = vpop.f32.mrb[0].mxu0
          %v646 = vpop.f32.mrb[0].mxu0
          %v647 = vpop.f32.mrb[0].mxu0
          %648 = vdwg.mxu0
          %v649 = vpack.c.bf16 %v644, %v644
          %vm650 = vcmask 60416
          %651 = vst.msk [vmem:[#allocation3] sm:$0xf] %vm650, %v585
          %652 = vst.msk [vmem:[#allocation4] sm:$0xf] %vm650, %v649
          %v654 = vunpack.c.l.b16 %v585
          %v655 = vpack.c.b16 %v654, %v654
          %656 = vrot.lane.b32.xlu0 %v655, 120
          %v657 = vpop.permute.xlu0 %656
          %s659 = scalar_lea.vmem [#allocation3], 4
          %660 = vst.msk [vmem:[%s659] sm:$0xf] %vm650, %v657
          %v662 = vunpack.c.l.b16 %v649
          %v663 = vpack.c.b16 %v662, %v662
          %664 = vrot.lane.b32.xlu0 %v663, 120
          %v665 = vpop.permute.xlu0 %664
          %s667 = scalar_lea.vmem [#allocation4], 4
          %668 = vst.msk [vmem:[%s667] sm:$0xf] %vm650, %v665
          %669 = vrot.lane.b32.xlu0 %v655, 112
          %v670 = vpop.permute.xlu0 %669
          %s672 = scalar_lea.vmem [#allocation3], 8
          %673 = vst.msk [vmem:[%s672] sm:$0xf] %vm650, %v670
          %674 = vrot.lane.b32.xlu0 %v663, 112
          %v675 = vpop.permute.xlu0 %674
          %s677 = scalar_lea.vmem [#allocation4], 8
          %678 = vst.msk [vmem:[%s677] sm:$0xf] %vm650, %v675
          %679 = vrot.lane.b32.xlu0 %v655, 104
          %v680 = vpop.permute.xlu0 %679
          %s682 = scalar_lea.vmem [#allocation3], 12
          %683 = vst.msk [vmem:[%s682] sm:$0xf] %vm650, %v680
          %684 = vrot.lane.b32.xlu0 %v663, 104
          %v685 = vpop.permute.xlu0 %684
          %s687 = scalar_lea.vmem [#allocation4], 12
          %688 = vst.msk [vmem:[%s687] sm:$0xf] %vm650, %v685
        $region84: #{tpu_custom_call.1} parent=59 // pred_fallthru
          _
        %v689 = vld [vmem:[%s442] sm:$0xf]
        %v690 = vld [vmem:[#allocation11] sm:$0xf]
        %v691 = vld [vmem:[#allocation11 + $0x4] sm:$0xf]
        %v692 = vld [vmem:[#allocation11 + $0x8] sm:$0xf]
        %v693 = vld [vmem:[#allocation11 + $0xc] sm:$0xf]
        %v694 = vld [vmem:[%s3] sm:$0x1]
        %v696 = vlaneseq
        %v697 = vshrl.u32 %v696, 7
        %v698 = vsub.s32 0, %v697
        %v699 = vrot.slane %v694, %v698
        %v705 = vunpack.c.l.b16 %v690
        %v706 = vunpack.c.l.b16 %v691
        %v707 = vunpack.c.l.b16 %v692
        %v708 = vunpack.c.l.b16 %v693
        %v709 = vpack.c.b16 %v706, %v705
        %v710 = vpack.c.b16 %v708, %v707
        %vm713 = vcmask 261120
        %v715 = vsel %vm713, %v689, 0
        %717 = vmatprep.subr.bf16.mxu0 0
        %718 = vmatpush1.bf16.msra.mxu0 %v709
        %719 = vmatprep.subr.bf16.mxu0 0
        %720 = vmatpush1.bf16.msra.mxu0 %v710
        %721 = vmatprep.subr.bf16.mxu0 0
        %722 = vmatpush1.bf16.msra.mxu0 0
        %723 = vmatprep.subr.bf16.mxu0 0
        %724 = vmatpush1.bf16.msra.mxu0 0
        %725 = vmatprep.subr.bf16.mxu0 0
        %726 = vmatpush1.bf16.msra.mxu0 0
        %727 = vmatprep.subr.bf16.mxu0 0
        %728 = vmatpush1.bf16.msra.mxu0 0
        %729 = vmatprep.subr.bf16.mxu0 0
        %730 = vmatpush1.bf16.msra.mxu0 0
        %731 = vmatprep.subr.bf16.mxu0 0
        %732 = vmatpush1.bf16.msra.mxu0 0
        %733 = vmatprep.subr.bf16.mxu0 0
        %734 = vmatpush1.bf16.msra.mxu0 0
        %735 = vmatprep.subr.bf16.mxu0 0
        %736 = vmatpush1.bf16.msra.mxu0 0
        %737 = vmatprep.subr.bf16.mxu0 0
        %738 = vmatpush1.bf16.msra.mxu0 0
        %739 = vmatprep.subr.bf16.mxu0 0
        %740 = vmatpush1.bf16.msra.mxu0 0
        %741 = vmatprep.subr.bf16.mxu0 0
        %742 = vmatpush1.bf16.msra.mxu0 0
        %743 = vmatprep.subr.bf16.mxu0 0
        %744 = vmatpush1.bf16.msra.mxu0 0
        %745 = vmatprep.subr.bf16.mxu0 0
        %746 = vmatpush1.bf16.msra.mxu0 0
        %747 = vmatprep.subr.bf16.mxu0 0
        %748 = vmatpush1.bf16.msra.mxu0 0
        %749 = vmatprep.mubr.bf16.mxu0 0
        %750 = vmatmul.mubr.bf16.gmra.mrb[0].mxu0 %v715
        %v751 = vpop.f32.mrb[0].mxu0
        %v752 = vadd.f32 %v699, %v751
        %v753 = vpop.f32.mrb[0].mxu0
        %v754 = vpop.f32.mrb[0].mxu0
        %v755 = vpop.f32.mrb[0].mxu0
        %756 = vdwg.mxu0
        %v757 = vpack.c.bf16 %v752, %v752
        %vm758 = vcmask 60416
        %759 = vst.msk [vmem:[#allocation2] sm:$0xf] %vm758, %v757
        %v761 = vunpack.c.l.b16 %v757
        %v762 = vpack.c.b16 %v761, %v761
        %763 = vrot.lane.b32.xlu0 %v762, 120
        %v764 = vpop.permute.xlu0 %763
        %s766 = scalar_lea.vmem [#allocation2], 4
        %767 = vst.msk [vmem:[%s766] sm:$0xf] %vm758, %v764
        %768 = vrot.lane.b32.xlu0 %v762, 112
        %v769 = vpop.permute.xlu0 %768
        %s771 = scalar_lea.vmem [#allocation2], 8
        %772 = vst.msk [vmem:[%s771] sm:$0xf] %vm758, %v769
        %773 = vrot.lane.b32.xlu0 %v762, 104
        %v774 = vpop.permute.xlu0 %773
        %s776 = scalar_lea.vmem [#allocation2], 12
        %777 = vst.msk [vmem:[%s776] sm:$0xf] %vm758, %v774
        %v778 = vld [vmem:[#allocation2] sm:$0xf]
        %v779 = vld [vmem:[#allocation2 + $0x4] sm:$0xf]
        %v780 = vld [vmem:[#allocation2 + $0x8] sm:$0xf]
        %v781 = vld [vmem:[#allocation2 + $0xc] sm:$0xf]
        %v782 = vld [vmem:[#allocation3] sm:$0xf]
        %v783 = vld [vmem:[#allocation3 + $0x4] sm:$0xf]
        %v784 = vld [vmem:[#allocation3 + $0x8] sm:$0xf]
        %v785 = vld [vmem:[#allocation3 + $0xc] sm:$0xf]
        %vm786 = vcmask 64512
        %v788 = vsel %vm786, %v778, 0
        %v791 = vsel %vm786, %v782, 0
        %793 = vmatprep.subr.bf16.mxu0 0
        %794 = vmatpush1.bf16.xpose.msra.mxu0 %v791
        %795 = vmatprep.subr.bf16.mxu0 0
        %796 = vmatpush1.bf16.xpose.msra.mxu0 0
        %797 = vmatprep.subr.bf16.mxu0 0
        %798 = vmatpush1.bf16.xpose.msra.mxu0 0
        %799 = vmatprep.subr.bf16.mxu0 0
        %800 = vmatpush1.bf16.xpose.msra.mxu0 0
        %801 = vmatprep.subr.bf16.mxu0 0
        %802 = vmatpush1.bf16.xpose.msra.mxu0 0
        %803 = vmatprep.subr.bf16.mxu0 0
        %804 = vmatpush1.bf16.xpose.msra.mxu0 0
        %805 = vmatprep.subr.bf16.mxu0 0
        %806 = vmatpush1.bf16.xpose.msra.mxu0 0
        %807 = vmatprep.subr.bf16.mxu0 0
        %808 = vmatpush1.bf16.xpose.msra.mxu0 0
        %809 = vmatprep.subr.bf16.mxu0 0
        %810 = vmatpush1.bf16.xpose.msra.mxu0 0
        %811 = vmatprep.subr.bf16.mxu0 0
        %812 = vmatpush1.bf16.xpose.msra.mxu0 0
        %813 = vmatprep.subr.bf16.mxu0 0
        %814 = vmatpush1.bf16.xpose.msra.mxu0 0
        %815 = vmatprep.subr.bf16.mxu0 0
        %816 = vmatpush1.bf16.xpose.msra.mxu0 0
        %817 = vmatprep.subr.bf16.mxu0 0
        %818 = vmatpush1.bf16.xpose.msra.mxu0 0
        %819 = vmatprep.subr.bf16.mxu0 0
        %820 = vmatpush1.bf16.xpose.msra.mxu0 0
        %821 = vmatprep.subr.bf16.mxu0 0
        %822 = vmatpush1.bf16.xpose.msra.mxu0 0
        %823 = vmatprep.subr.bf16.mxu0 0
        %824 = vmatpush1.bf16.xpose.msra.mxu0 0
        %825 = vmatprep.mubr.bf16.mxu0 0
        %826 = vmatmul.mubr.bf16.gmra.mrb[0].mxu0 %v788
        %v827 = vpop.f32.mrb[0].mxu0
        %v828 = vadd.f32 0.0, %v827
        %v829 = vpop.f32.mrb[0].mxu0
        %v830 = vpop.f32.mrb[0].mxu0
        %v831 = vpop.f32.mrb[0].mxu0
        %832 = vdwg.mxu0
        %v834 = vsel %vm786, %v779, 0
        %v837 = vsel %vm786, %v783, 0
        %839 = vmatprep.subr.bf16.mxu0 0
        %840 = vmatpush1.bf16.xpose.msra.mxu0 %v837
        %841 = vmatprep.subr.bf16.mxu0 0
        %842 = vmatpush1.bf16.xpose.msra.mxu0 0
        %843 = vmatprep.subr.bf16.mxu0 0
        %844 = vmatpush1.bf16.xpose.msra.mxu0 0
        %845 = vmatprep.subr.bf16.mxu0 0
        %846 = vmatpush1.bf16.xpose.msra.mxu0 0
        %847 = vmatprep.subr.bf16.mxu0 0
        %848 = vmatpush1.bf16.xpose.msra.mxu0 0
        %849 = vmatprep.subr.bf16.mxu0 0
        %850 = vmatpush1.bf16.xpose.msra.mxu0 0
        %851 = vmatprep.subr.bf16.mxu0 0
        %852 = vmatpush1.bf16.xpose.msra.mxu0 0
        %853 = vmatprep.subr.bf16.mxu0 0
        %854 = vmatpush1.bf16.xpose.msra.mxu0 0
        %855 = vmatprep.subr.bf16.mxu0 0
        %856 = vmatpush1.bf16.xpose.msra.mxu0 0
        %857 = vmatprep.subr.bf16.mxu0 0
        %858 = vmatpush1.bf16.xpose.msra.mxu0 0
        %859 = vmatprep.subr.bf16.mxu0 0
        %860 = vmatpush1.bf16.xpose.msra.mxu0 0
        %861 = vmatprep.subr.bf16.mxu0 0
        %862 = vmatpush1.bf16.xpose.msra.mxu0 0
        %863 = vmatprep.subr.bf16.mxu0 0
        %864 = vmatpush1.bf16.xpose.msra.mxu0 0
        %865 = vmatprep.subr.bf16.mxu0 0
        %866 = vmatpush1.bf16.xpose.msra.mxu0 0
        %867 = vmatprep.subr.bf16.mxu0 0
        %868 = vmatpush1.bf16.xpose.msra.mxu0 0
        %869 = vmatprep.subr.bf16.mxu0 0
        %870 = vmatpush1.bf16.xpose.msra.mxu0 0
        %871 = vmatprep.mubr.bf16.mxu0 0
        %872 = vmatmul.mubr.bf16.gmra.mrb[0].mxu0 %v834
        %v873 = vpop.f32.mrb[0].mxu0
        %v874 = vadd.f32 0.0, %v873
        %v875 = vpop.f32.mrb[0].mxu0
        %v876 = vpop.f32.mrb[0].mxu0
        %v877 = vpop.f32.mrb[0].mxu0
        %878 = vdwg.mxu0
        %v880 = vsel %vm786, %v780, 0
        %v883 = vsel %vm786, %v784, 0
        %885 = vmatprep.subr.bf16.mxu0 0
        %886 = vmatpush1.bf16.xpose.msra.mxu0 %v883
        %887 = vmatprep.subr.bf16.mxu0 0
        %888 = vmatpush1.bf16.xpose.msra.mxu0 0
        %889 = vmatprep.subr.bf16.mxu0 0
        %890 = vmatpush1.bf16.xpose.msra.mxu0 0
        %891 = vmatprep.subr.bf16.mxu0 0
        %892 = vmatpush1.bf16.xpose.msra.mxu0 0
        %893 = vmatprep.subr.bf16.mxu0 0
        %894 = vmatpush1.bf16.xpose.msra.mxu0 0
        %895 = vmatprep.subr.bf16.mxu0 0
        %896 = vmatpush1.bf16.xpose.msra.mxu0 0
        %897 = vmatprep.subr.bf16.mxu0 0
        %898 = vmatpush1.bf16.xpose.msra.mxu0 0
        %899 = vmatprep.subr.bf16.mxu0 0
        %900 = vmatpush1.bf16.xpose.msra.mxu0 0
        %901 = vmatprep.subr.bf16.mxu0 0
        %902 = vmatpush1.bf16.xpose.msra.mxu0 0
        %903 = vmatprep.subr.bf16.mxu0 0
        %904 = vmatpush1.bf16.xpose.msra.mxu0 0
        %905 = vmatprep.subr.bf16.mxu0 0
        %906 = vmatpush1.bf16.xpose.msra.mxu0 0
        %907 = vmatprep.subr.bf16.mxu0 0
        %908 = vmatpush1.bf16.xpose.msra.mxu0 0
        %909 = vmatprep.subr.bf16.mxu0 0
        %910 = vmatpush1.bf16.xpose.msra.mxu0 0
        %911 = vmatprep.subr.bf16.mxu0 0
        %912 = vmatpush1.bf16.xpose.msra.mxu0 0
        %913 = vmatprep.subr.bf16.mxu0 0
        %914 = vmatpush1.bf16.xpose.msra.mxu0 0
        %915 = vmatprep.subr.bf16.mxu0 0
        %916 = vmatpush1.bf16.xpose.msra.mxu0 0
        %917 = vmatprep.mubr.bf16.mxu0 0
        %918 = vmatmul.mubr.bf16.gmra.mrb[0].mxu0 %v880
        %v919 = vpop.f32.mrb[0].mxu0
        %v920 = vadd.f32 0.0, %v919
        %v921 = vpop.f32.mrb[0].mxu0
        %v922 = vpop.f32.mrb[0].mxu0
        %v923 = vpop.f32.mrb[0].mxu0
        %924 = vdwg.mxu0
        %v926 = vsel %vm786, %v781, 0
        %v929 = vsel %vm786, %v785, 0
        %931 = vmatprep.subr.bf16.mxu0 0
        %932 = vmatpush1.bf16.xpose.msra.mxu0 %v929
        %933 = vmatprep.subr.bf16.mxu0 0
        %934 = vmatpush1.bf16.xpose.msra.mxu0 0
        %935 = vmatprep.subr.bf16.mxu0 0
        %936 = vmatpush1.bf16.xpose.msra.mxu0 0
        %937 = vmatprep.subr.bf16.mxu0 0
        %938 = vmatpush1.bf16.xpose.msra.mxu0 0
        %939 = vmatprep.subr.bf16.mxu0 0
        %940 = vmatpush1.bf16.xpose.msra.mxu0 0
        %941 = vmatprep.subr.bf16.mxu0 0
        %942 = vmatpush1.bf16.xpose.msra.mxu0 0
        %943 = vmatprep.subr.bf16.mxu0 0
        %944 = vmatpush1.bf16.xpose.msra.mxu0 0
        %945 = vmatprep.subr.bf16.mxu0 0
        %946 = vmatpush1.bf16.xpose.msra.mxu0 0
        %947 = vmatprep.subr.bf16.mxu0 0
        %948 = vmatpush1.bf16.xpose.msra.mxu0 0
        %949 = vmatprep.subr.bf16.mxu0 0
        %950 = vmatpush1.bf16.xpose.msra.mxu0 0
        %951 = vmatprep.subr.bf16.mxu0 0
        %952 = vmatpush1.bf16.xpose.msra.mxu0 0
        %953 = vmatprep.subr.bf16.mxu0 0
        %954 = vmatpush1.bf16.xpose.msra.mxu0 0
        %955 = vmatprep.subr.bf16.mxu0 0
        %956 = vmatpush1.bf16.xpose.msra.mxu0 0
        %957 = vmatprep.subr.bf16.mxu0 0
        %958 = vmatpush1.bf16.xpose.msra.mxu0 0
        %959 = vmatprep.subr.bf16.mxu0 0
        %960 = vmatpush1.bf16.xpose.msra.mxu0 0
        %961 = vmatprep.subr.bf16.mxu0 0
        %962 = vmatpush1.bf16.xpose.msra.mxu0 0
        %963 = vmatprep.mubr.bf16.mxu0 0
        %964 = vmatmul.mubr.bf16.gmra.mrb[0].mxu0 %v926
        %v965 = vpop.f32.mrb[0].mxu0
        %v966 = vadd.f32 0.0, %v965
        %v967 = vpop.f32.mrb[0].mxu0
        %v968 = vpop.f32.mrb[0].mxu0
        %v969 = vpop.f32.mrb[0].mxu0
        %970 = vdwg.mxu0
        %v971 = vsel %vm786, %v828, -inf
        %972 = vmax.xlane.f32.xlu0 %v971
        %v973 = vpop.xlane.xlu0 %972
        %v974 = vsel %vm786, %v874, -inf
        %975 = vmax.xlane.f32.xlu0 %v974
        %v976 = vpop.xlane.xlu0 %975
        %v977 = vsel %vm786, %v920, -inf
        %978 = vmax.xlane.f32.xlu0 %v977
        %v979 = vpop.xlane.xlu0 %978
        %v980 = vsel %vm786, %v966, -inf
        %981 = vmax.xlane.f32.xlu0 %v980
        %v982 = vpop.xlane.xlu0 %981
        %v983 = vsub.f32 %v828, %v973
        %v984 = vsub.f32 %v874, %v976
        %v985 = vsub.f32 %v920, %v979
        %v986 = vsub.f32 %v966, %v982
        %v987 = vmul.f32 %v983, 1.442695
        %v988 = vpow.pop %v987
        %v989 = vmul.f32 %v984, 1.442695
        %v990 = vpow.pop %v989
        %v991 = vmul.f32 %v985, 1.442695
        %v992 = vpow.pop %v991
        %v993 = vmul.f32 %v986, 1.442695
        %v994 = vpow.pop %v993
        %v995 = vsel %vm786, %v988, 0.0
        %996 = vadd.xlane.f32.xlu0 %v995
        %v997 = vpop.xlane.xlu0 %996
        %v998 = vsel %vm786, %v990, 0.0
        %999 = vadd.xlane.f32.xlu0 %v998
        %v1000 = vpop.xlane.xlu0 %999
        %v1001 = vsel %vm786, %v992, 0.0
        %1002 = vadd.xlane.f32.xlu0 %v1001
        %v1003 = vpop.xlane.xlu0 %1002
        %v1004 = vsel %vm786, %v994, 0.0
        %1005 = vadd.xlane.f32.xlu0 %v1004
        %v1006 = vpop.xlane.xlu0 %1005
        %v1007 = vrcp.pop %v997
        %v1008 = vmul.f32 1.0, %v1007
        %v1009 = vrcp.pop %v1000
        %v1010 = vmul.f32 1.0, %v1009
        %v1011 = vrcp.pop %v1003
        %v1012 = vmul.f32 1.0, %v1011
        %v1013 = vrcp.pop %v1006
        %v1014 = vmul.f32 1.0, %v1013
        %v1015 = vmul.f32 %v988, %v1008
        %v1016 = vmul.f32 %v990, %v1010
        %v1017 = vmul.f32 %v992, %v1012
        %v1018 = vmul.f32 %v994, %v1014
        %1019 = vst.msk [vmem:[%s511] sm:$0xff] %vm786, %v1015
        %1020 = vst.msk [vmem:[%s511 + $0x8] sm:$0xff] %vm786, %v1016
        %1021 = vst.msk [vmem:[%s511 + $0x10] sm:$0xff] %vm786, %v1017
        %1022 = vst.msk [vmem:[%s511 + $0x18] sm:$0xff] %vm786, %v1018
        %v1023 = vpack.c.bf16 %v1015, %v1015
        %v1024 = vpack.c.bf16 %v1016, %v1016
        %v1025 = vpack.c.bf16 %v1017, %v1017
        %v1026 = vpack.c.bf16 %v1018, %v1018
        %v1027 = vld [vmem:[#allocation4] sm:$0xf]
        %v1028 = vld [vmem:[#allocation4 + $0x4] sm:$0xf]
        %v1029 = vld [vmem:[#allocation4 + $0x8] sm:$0xf]
        %v1030 = vld [vmem:[#allocation4 + $0xc] sm:$0xf]
        %v1032 = vsel %vm786, %v1023, 0
        %vm1034 = vcmask 1043456
        %v1036 = vsel %vm1034, %v1027, 0
        %1038 = vmatprep.subr.bf16.mxu0 0
        %1039 = vmatpush1.bf16.msra.mxu0 %v1036
        %1040 = vmatprep.subr.bf16.mxu0 0
        %1041 = vmatpush1.bf16.msra.mxu0 0
        %1042 = vmatprep.subr.bf16.mxu0 0
        %1043 = vmatpush1.bf16.msra.mxu0 0
        %1044 = vmatprep.subr.bf16.mxu0 0
        %1045 = vmatpush1.bf16.msra.mxu0 0
        %1046 = vmatprep.subr.bf16.mxu0 0
        %1047 = vmatpush1.bf16.msra.mxu0 0
        %1048 = vmatprep.subr.bf16.mxu0 0
        %1049 = vmatpush1.bf16.msra.mxu0 0
        %1050 = vmatprep.subr.bf16.mxu0 0
        %1051 = vmatpush1.bf16.msra.mxu0 0
        %1052 = vmatprep.subr.bf16.mxu0 0
        %1053 = vmatpush1.bf16.msra.mxu0 0
        %1054 = vmatprep.subr.bf16.mxu0 0
        %1055 = vmatpush1.bf16.msra.mxu0 0
        %1056 = vmatprep.subr.bf16.mxu0 0
        %1057 = vmatpush1.bf16.msra.mxu0 0
        %1058 = vmatprep.subr.bf16.mxu0 0
        %1059 = vmatpush1.bf16.msra.mxu0 0
        %1060 = vmatprep.subr.bf16.mxu0 0
        %1061 = vmatpush1.bf16.msra.mxu0 0
        %1062 = vmatprep.subr.bf16.mxu0 0
        %1063 = vmatpush1.bf16.msra.mxu0 0
        %1064 = vmatprep.subr.bf16.mxu0 0
        %1065 = vmatpush1.bf16.msra.mxu0 0
        %1066 = vmatprep.subr.bf16.mxu0 0
        %1067 = vmatpush1.bf16.msra.mxu0 0
        %1068 = vmatprep.subr.bf16.mxu0 0
        %1069 = vmatpush1.bf16.msra.mxu0 0
        %1070 = vmatprep.mubr.bf16.mxu0 0
        %1071 = vmatmul.mubr.bf16.gmra.mrb[0].mxu0 %v1032
        %v1072 = vpop.f32.mrb[0].mxu0
        %v1073 = vadd.f32 0.0, %v1072
        %v1074 = vpop.f32.mrb[0].mxu0
        %v1075 = vpop.f32.mrb[0].mxu0
        %v1076 = vpop.f32.mrb[0].mxu0
        %1077 = vdwg.mxu0
        %v1079 = vsel %vm786, %v1024, 0
        %v1082 = vsel %vm1034, %v1028, 0
        %1084 = vmatprep.subr.bf16.mxu0 0
        %1085 = vmatpush1.bf16.msra.mxu0 %v1082
        %1086 = vmatprep.subr.bf16.mxu0 0
        %1087 = vmatpush1.bf16.msra.mxu0 0
        %1088 = vmatprep.subr.bf16.mxu0 0
        %1089 = vmatpush1.bf16.msra.mxu0 0
        %1090 = vmatprep.subr.bf16.mxu0 0
        %1091 = vmatpush1.bf16.msra.mxu0 0
        %1092 = vmatprep.subr.bf16.mxu0 0
        %1093 = vmatpush1.bf16.msra.mxu0 0
        %1094 = vmatprep.subr.bf16.mxu0 0
        %1095 = vmatpush1.bf16.msra.mxu0 0
        %1096 = vmatprep.subr.bf16.mxu0 0
        %1097 = vmatpush1.bf16.msra.mxu0 0
        %1098 = vmatprep.subr.bf16.mxu0 0
        %1099 = vmatpush1.bf16.msra.mxu0 0
        %1100 = vmatprep.subr.bf16.mxu0 0
        %1101 = vmatpush1.bf16.msra.mxu0 0
        %1102 = vmatprep.subr.bf16.mxu0 0
        %1103 = vmatpush1.bf16.msra.mxu0 0
        %1104 = vmatprep.subr.bf16.mxu0 0
        %1105 = vmatpush1.bf16.msra.mxu0 0
        %1106 = vmatprep.subr.bf16.mxu0 0
        %1107 = vmatpush1.bf16.msra.mxu0 0
        %1108 = vmatprep.subr.bf16.mxu0 0
        %1109 = vmatpush1.bf16.msra.mxu0 0
        %1110 = vmatprep.subr.bf16.mxu0 0
        %1111 = vmatpush1.bf16.msra.mxu0 0
        %1112 = vmatprep.subr.bf16.mxu0 0
        %1113 = vmatpush1.bf16.msra.mxu0 0
        %1114 = vmatprep.subr.bf16.mxu0 0
        %1115 = vmatpush1.bf16.msra.mxu0 0
        %1116 = vmatprep.mubr.bf16.mxu0 0
        %1117 = vmatmul.mubr.bf16.gmra.mrb[0].mxu0 %v1079
        %v1118 = vpop.f32.mrb[0].mxu0
        %v1119 = vadd.f32 0.0, %v1118
        %v1120 = vpop.f32.mrb[0].mxu0
        %v1121 = vpop.f32.mrb[0].mxu0
        %v1122 = vpop.f32.mrb[0].mxu0
        %1123 = vdwg.mxu0
        %v1125 = vsel %vm786, %v1025, 0
        %v1128 = vsel %vm1034, %v1029, 0
        %1130 = vmatprep.subr.bf16.mxu0 0
        %1131 = vmatpush1.bf16.msra.mxu0 %v1128
        %1132 = vmatprep.subr.bf16.mxu0 0
        %1133 = vmatpush1.bf16.msra.mxu0 0
        %1134 = vmatprep.subr.bf16.mxu0 0
        %1135 = vmatpush1.bf16.msra.mxu0 0
        %1136 = vmatprep.subr.bf16.mxu0 0
        %1137 = vmatpush1.bf16.msra.mxu0 0
        %1138 = vmatprep.subr.bf16.mxu0 0
        %1139 = vmatpush1.bf16.msra.mxu0 0
        %1140 = vmatprep.subr.bf16.mxu0 0
        %1141 = vmatpush1.bf16.msra.mxu0 0
        %1142 = vmatprep.subr.bf16.mxu0 0
        %1143 = vmatpush1.bf16.msra.mxu0 0
        %1144 = vmatprep.subr.bf16.mxu0 0
        %1145 = vmatpush1.bf16.msra.mxu0 0
        %1146 = vmatprep.subr.bf16.mxu0 0
        %1147 = vmatpush1.bf16.msra.mxu0 0
        %1148 = vmatprep.subr.bf16.mxu0 0
        %1149 = vmatpush1.bf16.msra.mxu0 0
        %1150 = vmatprep.subr.bf16.mxu0 0
        %1151 = vmatpush1.bf16.msra.mxu0 0
        %1152 = vmatprep.subr.bf16.mxu0 0
        %1153 = vmatpush1.bf16.msra.mxu0 0
        %1154 = vmatprep.subr.bf16.mxu0 0
        %1155 = vmatpush1.bf16.msra.mxu0 0
        %1156 = vmatprep.subr.bf16.mxu0 0
        %1157 = vmatpush1.bf16.msra.mxu0 0
        %1158 = vmatprep.subr.bf16.mxu0 0
        %1159 = vmatpush1.bf16.msra.mxu0 0
        %1160 = vmatprep.subr.bf16.mxu0 0
        %1161 = vmatpush1.bf16.msra.mxu0 0
        %1162 = vmatprep.mubr.bf16.mxu0 0
        %1163 = vmatmul.mubr.bf16.gmra.mrb[0].mxu0 %v1125
        %v1164 = vpop.f32.mrb[0].mxu0
        %v1165 = vadd.f32 0.0, %v1164
        %v1166 = vpop.f32.mrb[0].mxu0
        %v1167 = vpop.f32.mrb[0].mxu0
        %v1168 = vpop.f32.mrb[0].mxu0
        %1169 = vdwg.mxu0
        %v1171 = vsel %vm786, %v1026, 0
        %v1174 = vsel %vm1034, %v1030, 0
        %1176 = vmatprep.subr.bf16.mxu0 0
        %1177 = vmatpush1.bf16.msra.mxu0 %v1174
        %1178 = vmatprep.subr.bf16.mxu0 0
        %1179 = vmatpush1.bf16.msra.mxu0 0
        %1180 = vmatprep.subr.bf16.mxu0 0
        %1181 = vmatpush1.bf16.msra.mxu0 0
        %1182 = vmatprep.subr.bf16.mxu0 0
        %1183 = vmatpush1.bf16.msra.mxu0 0
        %1184 = vmatprep.subr.bf16.mxu0 0
        %1185 = vmatpush1.bf16.msra.mxu0 0
        %1186 = vmatprep.subr.bf16.mxu0 0
        %1187 = vmatpush1.bf16.msra.mxu0 0
        %1188 = vmatprep.subr.bf16.mxu0 0
        %1189 = vmatpush1.bf16.msra.mxu0 0
        %1190 = vmatprep.subr.bf16.mxu0 0
        %1191 = vmatpush1.bf16.msra.mxu0 0
        %1192 = vmatprep.subr.bf16.mxu0 0
        %1193 = vmatpush1.bf16.msra.mxu0 0
        %1194 = vmatprep.subr.bf16.mxu0 0
        %1195 = vmatpush1.bf16.msra.mxu0 0
        %1196 = vmatprep.subr.bf16.mxu0 0
        %1197 = vmatpush1.bf16.msra.mxu0 0
        %1198 = vmatprep.subr.bf16.mxu0 0
        %1199 = vmatpush1.bf16.msra.mxu0 0
        %1200 = vmatprep.subr.bf16.mxu0 0
        %1201 = vmatpush1.bf16.msra.mxu0 0
        %1202 = vmatprep.subr.bf16.mxu0 0
        %1203 = vmatpush1.bf16.msra.mxu0 0
        %1204 = vmatprep.subr.bf16.mxu0 0
        %1205 = vmatpush1.bf16.msra.mxu0 0
        %1206 = vmatprep.subr.bf16.mxu0 0
        %1207 = vmatpush1.bf16.msra.mxu0 0
        %1208 = vmatprep.mubr.bf16.mxu0 0
        %1209 = vmatmul.mubr.bf16.gmra.mrb[0].mxu0 %v1171
        %v1210 = vpop.f32.mrb[0].mxu0
        %v1211 = vadd.f32 0.0, %v1210
        %v1212 = vpop.f32.mrb[0].mxu0
        %v1213 = vpop.f32.mrb[0].mxu0
        %v1214 = vpop.f32.mrb[0].mxu0
        %1215 = vdwg.mxu0
        %v1216 = vpack.c.bf16 %v1073, %v1073
        %v1217 = vpack.c.bf16 %v1119, %v1119
        %v1218 = vpack.c.bf16 %v1165, %v1165
        %v1219 = vpack.c.bf16 %v1211, %v1211
        %1220 = vst.msk [vmem:[#allocation5] sm:$0xf] %vm758, %v1216
        %v1222 = vunpack.c.l.b16 %v1217
        %v1223 = vpack.c.b16 %v1222, %v1222
        %1224 = vrot.lane.b32.xlu0 %v1223, 8
        %v1225 = vpop.permute.xlu0 %1224
        %vm1227 = vcmask 126016
        %1228 = vst.msk [vmem:[#allocation5] sm:$0xf] %vm1227, %v1225
        %v1230 = vunpack.c.l.b16 %v1218
        %v1231 = vpack.c.b16 %v1230, %v1230
        %1232 = vrot.lane.b32.xlu0 %v1231, 16
        %v1233 = vpop.permute.xlu0 %1232
        %vm1235 = vcmask 191616
        %1236 = vst.msk [vmem:[#allocation5] sm:$0xf] %vm1235, %v1233
        %v1238 = vunpack.c.l.b16 %v1219
        %v1239 = vpack.c.b16 %v1238, %v1238
        %1240 = vrot.lane.b32.xlu0 %v1239, 24
        %v1241 = vpop.permute.xlu0 %1240
        %vm1243 = vcmask 257216
        %1244 = vst.msk [vmem:[#allocation5] sm:$0xf] %vm1243, %v1241
        %v1245 = vld [vmem:[#allocation5] sm:$0xf]
        %v1246 = vld [vmem:[#allocation14] sm:$0xf]
        %v1247 = vld [vmem:[#allocation14 + $0x4] sm:$0xf]
        %v1248 = vld [vmem:[#allocation14 + $0x8] sm:$0xf]
        %v1249 = vld [vmem:[#allocation14 + $0xc] sm:$0xf]
        %v1250 = vld [vmem:[%s9] sm:$0x1]
        %v1252 = vlaneseq
        %v1253 = vshrl.u32 %v1252, 7
        %v1254 = vsub.s32 0, %v1253
        %v1255 = vrot.slane %v1250, %v1254
        %v1261 = vunpack.c.l.b16 %v1246
        %v1262 = vunpack.c.l.b16 %v1247
        %v1263 = vunpack.c.l.b16 %v1248
        %v1264 = vunpack.c.l.b16 %v1249
        %v1265 = vpack.c.b16 %v1262, %v1261
        %v1266 = vpack.c.b16 %v1264, %v1263
        %v1270 = vsel %vm713, %v1245, 0
        %1272 = vmatprep.subr.bf16.mxu0 0
        %1273 = vmatpush1.bf16.msra.mxu0 %v1265
        %1274 = vmatprep.subr.bf16.mxu0 0
        %1275 = vmatpush1.bf16.msra.mxu0 %v1266
        %1276 = vmatprep.subr.bf16.mxu0 0
        %1277 = vmatpush1.bf16.msra.mxu0 0
        %1278 = vmatprep.subr.bf16.mxu0 0
        %1279 = vmatpush1.bf16.msra.mxu0 0
        %1280 = vmatprep.subr.bf16.mxu0 0
        %1281 = vmatpush1.bf16.msra.mxu0 0
        %1282 = vmatprep.subr.bf16.mxu0 0
        %1283 = vmatpush1.bf16.msra.mxu0 0
        %1284 = vmatprep.subr.bf16.mxu0 0
        %1285 = vmatpush1.bf16.msra.mxu0 0
        %1286 = vmatprep.subr.bf16.mxu0 0
        %1287 = vmatpush1.bf16.msra.mxu0 0
        %1288 = vmatprep.subr.bf16.mxu0 0
        %1289 = vmatpush1.bf16.msra.mxu0 0
        %1290 = vmatprep.subr.bf16.mxu0 0
        %1291 = vmatpush1.bf16.msra.mxu0 0
        %1292 = vmatprep.subr.bf16.mxu0 0
        %1293 = vmatpush1.bf16.msra.mxu0 0
        %1294 = vmatprep.subr.bf16.mxu0 0
        %1295 = vmatpush1.bf16.msra.mxu0 0
        %1296 = vmatprep.subr.bf16.mxu0 0
        %1297 = vmatpush1.bf16.msra.mxu0 0
        %1298 = vmatprep.subr.bf16.mxu0 0
        %1299 = vmatpush1.bf16.msra.mxu0 0
        %1300 = vmatprep.subr.bf16.mxu0 0
        %1301 = vmatpush1.bf16.msra.mxu0 0
        %1302 = vmatprep.subr.bf16.mxu0 0
        %1303 = vmatpush1.bf16.msra.mxu0 0
        %1304 = vmatprep.mubr.bf16.mxu0 0
        %1305 = vmatmul.mubr.bf16.gmra.mrb[0].mxu0 %v1270
        %v1306 = vpop.f32.mrb[0].mxu0
        %v1307 = vadd.f32 %v1255, %v1306
        %v1308 = vpop.f32.mrb[0].mxu0
        %v1309 = vpop.f32.mrb[0].mxu0
        %v1310 = vpop.f32.mrb[0].mxu0
        %1311 = vdwg.mxu0
        %1312 = vst.msk [vmem:[%s504] sm:$0xff] %vm713, %v1307
        %s1313 = sand.u32 %s280, 1
        %s1314 = scalar_lea.sflag [#allocation8], %s1313
        %s1315 = sand.u32 %s280, 1
        %s1316 = smul.addr %s1315, 8
        %s1317 = scalar_lea.vmem [#allocation15], %s1316
        %s1318 = sand.u32 %s308, 1
        %s1319 = scalar_lea.sflag [#allocation17], %s1318
        %s1320 = sand.u32 %s308, 1
        %s1321 = smul.addr %s1320, 32
        %s1322 = scalar_lea.vmem [#allocation16], %s1321
        // Predicated region
        $region85: #{tpu_custom_call.1} parent=59 // pred_check
          %p1323 = pneg %p290
        $region86: #{tpu_custom_call.1} parent=59 // pred_check_branch
          %1325 = sbr.rel (%p1323) target = $region88
        $region87: #{tpu_custom_call.1} parent=59 // pred_region
          %s1327 = ssub.s32 128, 128
          %1328 = vsyncadd %s1314, %s1327
          %s1329 = sadd.s32 %s41, %s40
          %s1330 = smul.addr %s1329, 128
          %s1331 = scalar_lea.hbm %s10, %s1330
          %s1333 = sshll.u32 %s1317, 4
          %s1334 = int_to_ptr.vmem [resolvable:$true] %s1333
          %1336 = dma.vmem_to_hbm [thread:$0]  %s1334, 128, %s1331, %s1314
        $region88: #{tpu_custom_call.1} parent=59 // pred_fallthru
          _
        // Predicated region
        $region89: #{tpu_custom_call.1} parent=59 // pred_check
          %p1337 = pneg %p318
        $region90: #{tpu_custom_call.1} parent=59 // pred_check_branch
          %1339 = sbr.rel (%p1337) target = $region92
        $region91: #{tpu_custom_call.1} parent=59 // pred_region
          %s1341 = ssub.s32 512, 512
          %1342 = vsyncadd %s1319, %s1341
          %s1343 = smul.addr %s40, 4
          %s1344 = sadd.s32 %s41, %s1343
          %s1345 = smul.addr %s1344, 128
          %s1346 = scalar_lea.hbm %s11, %s1345
          %s1347 = sshll.u32 %s1322, 4
          %s1348 = int_to_ptr.vmem [resolvable:$true] %s1347
          %1353 = dma.vmem_to_hbm [thread:$0]  %s1348, 512, %s1346, %s1319, 128, 128, 8
        $region92: #{tpu_custom_call.1} parent=59 // pred_fallthru
          _
      $region60: #{tpu_custom_call.1} parent=5 // pred_fallthru
        _
      %p1354 = scmp.le.s32.totalorder 2, %s31
      // Predicated region
      $region93: #{tpu_custom_call.1} parent=5 // pred_check
        %p1355 = pneg %p1354
      $region94: #{tpu_custom_call.1} parent=5 // pred_check_branch
        %1357 = sbr.rel (%p1355) target = $region96
      $region95: #{tpu_custom_call.1} parent=5 // pred_region
        %s1358 = ssub.s32 %s31, 2
        // Predicated region
        $region97: #{tpu_custom_call.1} parent=95 // pred_check
          %p1359 = pneg %p296
        $region98: #{tpu_custom_call.1} parent=95 // pred_check_branch
          %1361 = sbr.rel (%p1359) target = $region100
        $region99: #{tpu_custom_call.1} parent=95 // pred_region
          %s1362 = sand.u32 %s281, 1
          %s1363 = scalar_lea.sflag [#allocation8], %s1362
          %s1364 = sand.u32 %s281, 1
          %s1365 = smul.addr %s1364, 8
          %s1366 = scalar_lea.vmem [#allocation15], %s1365
          %1367 = dma.done %s1363, 128
        $region100: #{tpu_custom_call.1} parent=95 // pred_fallthru
          _
        // Predicated region
        $region101: #{tpu_custom_call.1} parent=95 // pred_check
          %p1368 = pneg %p324
        $region102: #{tpu_custom_call.1} parent=95 // pred_check_branch
          %1370 = sbr.rel (%p1368) target = $region104
        $region103: #{tpu_custom_call.1} parent=95 // pred_region
          %s1371 = sand.u32 %s309, 1
          %s1372 = scalar_lea.sflag [#allocation17], %s1371
          %s1373 = sand.u32 %s309, 1
          %s1374 = smul.addr %s1373, 32
          %s1375 = scalar_lea.vmem [#allocation16], %s1374
          %1376 = dma.done %s1372, 512
        $region104: #{tpu_custom_call.1} parent=95 // pred_fallthru
          _
      $region96: #{tpu_custom_call.1} parent=5 // pred_fallthru
        _
    $region6: #{tpu_custom_call.1} parent=1 // loop_footer
      %s35 = sadd.s32 1, %s31
    $region7: #{tpu_custom_call.1} parent=1 // loop_footer_branch
      %30 = sbr.rel target = $region3
    $region8: #{tpu_custom_call.1} parent=1 // loop_exit
      _
    %1377 = vsyncpa [#allocation7], 1
    %s1378 = scalar_lea.sflag [#allocation7], 1
    %1379 = vsyncpa %s1378, 1
    %1380 = vsyncpa [#allocation10], 1
    %s1381 = scalar_lea.sflag [#allocation10], 1
    %1382 = vsyncpa %s1381, 1
    %1383 = vsyncpa [#allocation13], 1
    %1384 = vsyncpa [#allocation8], 1
    %s1385 = scalar_lea.sflag [#allocation8], 1
    %1386 = vsyncpa %s1385, 1
    %1387 = vsyncpa [#allocation17], 1
    %s1388 = scalar_lea.sflag [#allocation17], 1
    %1389 = vsyncpa %s1388, 1

</llo_original>
